<compile_context>
chip_gen: v7x
topology: tpu7x:2x2x1
jax: 0.10.0
libtpu: 0.0.40
codegen_flags: <defaults>
</compile_context>

<pallas_src>
import functools

import jax
import jax.numpy as jnp
from jax import lax
from jax.experimental import pallas as pl
from jax.experimental.pallas import tpu as pltpu


def _transformer_block_kernel(
    xb_ref,                      # (1, N, C)   bf16 full sequence (LN1 -> K/V)
    xq_ref,                      # (1, Tq, C)  f32 query slab (residual path)
    g1_ref, be1_ref,             # (1, C)      LayerNorm1 gamma/beta (f32)
    wq_ref, bq_ref,              # (C, C) bf16 (scale folded), (1, C) f32
    wk_ref, bk_ref,              # (C, C) bf16, (1, C) f32
    wv_ref, bv_ref,              # (C, C) bf16, (1, C) f32
    wo_ref, bo_ref,              # (C, C) bf16, (1, C) f32   output projection
    g2_ref, be2_ref,             # (1, C)      LayerNorm2 gamma/beta (f32)
    w1_ref, bm1_ref,             # (C, Hm) bf16, (1, Hm) f32 MLP in
    w2_ref, bm2_ref,             # (Hm, C) bf16, (1, C) f32  MLP out
    o_ref,                       # (1, Tq, C)  output block
    xn1_sc,                      # (N, C) bf16 scratch: cached LayerNorm1(x)
    k_sc,                        # (N, C) bf16 scratch: cached K
    v_sc,                        # (N, C) bf16 scratch: cached V
    occ_sc,                      # (Tq, C) bf16 scratch: per-head output concat
    *, num_heads, head_dim, q_tile, eps, bf16_eup):

    qi = pl.program_id(1)

    def layer_norm(v, g, b):
        mu = jnp.mean(v, axis=-1, keepdims=True)
        c = v - mu
        var = jnp.mean(c * c, axis=-1, keepdims=True)
        return (c * lax.rsqrt(var + eps)) * g + b

    # ---- once per batch element: LN1 over the full sequence + K/V cache ----
    @pl.when(qi == 0)
    def _():
        x_full = xb_ref[0].astype(jnp.float32)                     # (N, C)
        xn1_b = layer_norm(x_full, g1_ref[0], be1_ref[0]).astype(jnp.bfloat16)
        xn1_sc[...] = xn1_b
        k = (jnp.dot(xn1_b, wk_ref[...], preferred_element_type=jnp.float32)
             + bk_ref[0])                                           # (N, C)
        v = (jnp.dot(xn1_b, wv_ref[...], preferred_element_type=jnp.float32)
             + bv_ref[0])                                           # (N, C)
        k_sc[...] = k.astype(jnp.bfloat16)
        v_sc[...] = v.astype(jnp.bfloat16)

    # ---- per query tile ----
    xq = xq_ref[0].astype(jnp.float32)                              # (Tq, C)
    q_start = pl.multiple_of(qi * q_tile, q_tile)
    xqn1_b = xn1_sc[pl.ds(q_start, q_tile), :]                      # (Tq, C) bf16

    # full-width Q projection (attention scale folded host-side into wq/bq).
    q_all = (jnp.dot(xqn1_b, wq_ref[...], preferred_element_type=jnp.float32)
             + bq_ref[0])                                           # (Tq, C)

    # Per-head attention (intrinsically head_dim-wide); context vectors are
    # written straight into the bf16 concat buffer -> one full-width out-proj.
    # TODO(synk): at production head counts move heads to a grid axis /
    # lax.fori_loop to bound live ranges instead of a static unroll.
    for h in range(num_heads):
        sl = slice(h * head_dim, (h + 1) * head_dim)
        q_h = q_all[:, sl].astype(jnp.bfloat16)                     # (Tq, hd)
        k_h = k_sc[:, sl]                                           # (N, hd)
        v_h = v_sc[:, sl]                                           # (N, hd)

        # q @ k^T without materializing k.T: contract last dims on the MXU.
        s = lax.dot_general(q_h, k_h, (((1,), (1,)), ((), ())),
                            preferred_element_type=jnp.float32)     # (Tq, N)
        s = s - jnp.max(s, axis=-1, keepdims=True)
        if bf16_eup:   # bf16 EUP path (v6e/v7x only)
            p = jnp.exp(s.astype(jnp.bfloat16)).astype(jnp.float32)
        else:
            p = jnp.exp(s)
        p = p * pl.reciprocal(jnp.sum(p, axis=-1, keepdims=True), approx=True)

        occ_sc[:, sl] = jnp.dot(
            p.astype(jnp.bfloat16), v_h,
            preferred_element_type=jnp.float32).astype(jnp.bfloat16)

    # single full-width output projection (contraction K = C).
    attn_out = (jnp.dot(occ_sc[...], wo_ref[...],
                        preferred_element_type=jnp.float32) + bo_ref[0])
    y1 = xq + attn_out            # residual 1; dropout p=0.0 -> identity

    # ---- MLP branch on the query slab ----
    xn2_b = layer_norm(y1, g2_ref[0], be2_ref[0]).astype(jnp.bfloat16)
    h1 = (jnp.dot(xn2_b, w1_ref[...], preferred_element_type=jnp.float32)
          + bm1_ref[0])                                             # (Tq, Hm)
    # tanh-approx GELU (tanh lowers to the EUP slot).
    # TODO(synk): PyTorch nn.GELU default is the exact erf form; the tanh
    # approximation differs by < 1e-3 absolute.
    inner = 0.7978845608028654 * (h1 + 0.044715 * h1 * h1 * h1)
    if bf16_eup:
        t = jnp.tanh(inner.astype(jnp.bfloat16)).astype(jnp.float32)
    else:
        t = jnp.tanh(inner)
    g = 0.5 * h1 * (1.0 + t)
    m = (jnp.dot(g.astype(jnp.bfloat16), w2_ref[...],
                 preferred_element_type=jnp.float32) + bm2_ref[0])  # (Tq, C)

    o_ref[0] = (y1 + m).astype(o_ref.dtype)


def _vmem_capacity_bytes():
    try:
        return int(pltpu.get_tpu_info().vmem_capacity_bytes)
    except Exception:
        return 64 << 20   # conservative: v7x per-TensorCore VMEM


def _pick_q_tile(N, C, Hm, vmem_bytes):
    """Largest q_tile dividing N that fits a generation-aware VMEM budget."""
    budget = int(vmem_bytes * 0.6)
    # per-batch resident: bf16 x block (double-buffered) + bf16 LN1/K/V caches
    # + single-buffered bf16 weights.
    fixed = 2 * N * C * 2 + 3 * N * C * 2 + (4 * C * C + 2 * C * Hm) * 2

    def tile_bytes(t):
        # f32 scores (t,N), f32 MLP hidden (t,Hm), a handful of (t,C) f32
        # slabs, plus double-buffered f32 in/out slabs.
        return t * (4 * N + 4 * Hm + 24 * C) + 4 * t * C * 4

    cap = 512 if vmem_bytes >= (96 << 20) else 256   # smaller tiles on v7x
    if N <= cap:
        return N
    best = None
    for c in (512, 256, 128, 64, 32, 16, 8):
        if c <= cap and N % c == 0:
            if best is None:
                best = c
            if fixed + tile_bytes(c) <= budget:
                return c
    return best if best is not None else N


def transformer_block(x, gamma1, beta1, wqkv, bqkv, wproj, bproj,
                      gamma2, beta2, w_mlp1, b_mlp1, w_mlp2, b_mlp2,
                      *, num_heads, eps=1e-5, q_tile=None, bf16_eup=False):
    """x: (B, N, C). Weights in PyTorch layout: wqkv (3C, C), wproj (C, C),
    w_mlp1 (Hm, C), w_mlp2 (C, Hm); biases 1-D."""
    B, N, C = x.shape
    head_dim = C // num_heads
    assert head_dim * num_heads == C
    scale = head_dim ** (-0.5)
    Hm = w_mlp1.shape[0]

    vmem_bytes = _vmem_capacity_bytes()
    if q_tile is None:
        q_tile = _pick_q_tile(N, C, Hm, vmem_bytes)
    assert N % q_tile == 0
    # leave headroom under the physical per-core VMEM (64 MiB on v7x).
    vmem_limit = max(32 << 20, min(int(vmem_bytes * 0.75), 96 << 20))

    wb = jnp.bfloat16
    wq, wk, wv = jnp.split(wqkv, 3, axis=0)          # each (C, C)
    bq, bk, bv = jnp.split(bqkv, 3)                  # each (C,)

    # Pre-transpose, fold the attention scale into the Q projection, cast bf16.
    wq_t = (wq.T * scale).astype(wb)
    wk_t = wk.T.astype(wb)
    wv_t = wv.T.astype(wb)
    wo_t = wproj.T.astype(wb)
    w1_t = w_mlp1.T.astype(wb)                       # (C, Hm)
    w2_t = w_mlp2.T.astype(wb)                       # (Hm, C)

    bq2 = (bq * scale).reshape(1, C)
    bk2 = bk.reshape(1, C)
    bv2 = bv.reshape(1, C)
    bo2 = bproj.reshape(1, C)
    bm1 = b_mlp1.reshape(1, Hm)
    bm2 = b_mlp2.reshape(1, C)
    g1 = gamma1.reshape(1, C)
    be1 = beta1.reshape(1, C)
    g2 = gamma2.reshape(1, C)
    be2 = beta2.reshape(1, C)

    params = (g1, be1, wq_t, bq2, wk_t, bk2, wv_t, bv2, wo_t, bo2,
              g2, be2, w1_t, bm1, w2_t, bm2)

    # Full-sequence bf16 copy feeds only the LN1 -> K/V path (residual stays f32).
    x_bf = x.astype(jnp.bfloat16)

    kernel = functools.partial(_transformer_block_kernel,
                               num_heads=num_heads, head_dim=head_dim,
                               q_tile=q_tile, eps=eps, bf16_eup=bf16_eup)

    def _const_spec(arr):
        # Grid-invariant parameters: single-buffered (no pipelining benefit).
        return pl.BlockSpec(arr.shape, lambda b, qi: (0, 0),
                            pipeline_mode=pl.Buffered(1))

    grid = (B, N // q_tile)

    return pl.pallas_call(
        kernel,
        out_shape=jax.ShapeDtypeStruct((B, N, C), x.dtype),
        grid_spec=pltpu.PrefetchScalarGridSpec(
            num_scalar_prefetch=0,
            grid=grid,
            in_specs=[pl.BlockSpec((1, N, C), lambda b, qi: (b, 0, 0)),
                      pl.BlockSpec((1, q_tile, C), lambda b, qi: (b, qi, 0))]
                     + [_const_spec(p) for p in params],
            out_specs=pl.BlockSpec((1, q_tile, C), lambda b, qi: (b, qi, 0)),
            scratch_shapes=[
                pltpu.VMEM((N, C), jnp.bfloat16),        # cached LN1(x)
                pltpu.VMEM((N, C), jnp.bfloat16),        # cached K
                pltpu.VMEM((N, C), jnp.bfloat16),        # cached V
                pltpu.VMEM((q_tile, C), jnp.bfloat16),   # per-head out concat
            ],
        ),
        compiler_params=pltpu.CompilerParams(
            # B parallel (megacore); q-tile axis sequential so the per-batch
            # K/V cache in scratch can be reused across tiles.
            dimension_semantics=("parallel", "arbitrary"),
            vmem_limit_bytes=vmem_limit,
        ),
    )(x_bf, x, *params)


def _reference(x, gamma1, beta1, wqkv, bqkv, wproj, bproj,
               gamma2, beta2, w_mlp1, b_mlp1, w_mlp2, b_mlp2,
               num_heads, eps=1e-5):
    """Pure-JAX replica of the PyTorch TransformerBlock forward (dropout=0)."""
    def ln(v, g, b):
        mu = v.mean(-1, keepdims=True)
        var = ((v - mu) ** 2).mean(-1, keepdims=True)
        return (v - mu) / jnp.sqrt(var + eps) * g + b

    B, N, C = x.shape
    hd = C // num_heads
    scale = hd ** (-0.5)

    xn = ln(x, gamma1, beta1)
    qkv = xn @ wqkv.T + bqkv
    qkv = qkv.reshape(B, N, 3, num_heads, hd).transpose(2, 0, 3, 1, 4)
    q, k, v = qkv[0], qkv[1], qkv[2]
    attn = jnp.einsum("bhnd,bhmd->bhnm", q, k) * scale
    attn = jax.nn.softmax(attn, axis=-1)
    out = jnp.einsum("bhnm,bhmd->bhnd", attn, v)
    out = out.transpose(0, 2, 1, 3).reshape(B, N, C)
    y1 = x + (out @ wproj.T + bproj)

    xn2 = ln(y1, gamma2, beta2)
    h = xn2 @ w_mlp1.T + b_mlp1
    g = jax.nn.gelu(h, approximate=False)   # PyTorch nn.GELU (exact) form
    return y1 + (g @ w_mlp2.T + b_mlp2)


if __name__ == "__main__":
    B, N = 2, 8
    embed_dim, num_heads, mlp_ratio = 32, 4, 4.0
    mlp_hidden = int(embed_dim * mlp_ratio)   # 128

    key = jax.random.PRNGKey(0)
    ks = jax.random.split(key, 13)

    x = jax.random.normal(ks[0], (B, N, embed_dim), jnp.float32)
    wqkv = jax.random.normal(ks[1], (3 * embed_dim, embed_dim), jnp.float32) * 0.05
    bqkv = jax.random.normal(ks[2], (3 * embed_dim,), jnp.float32) * 0.05
    wproj = jax.random.normal(ks[3], (embed_dim, embed_dim), jnp.float32) * 0.05
    bproj = jax.random.normal(ks[4], (embed_dim,), jnp.float32) * 0.05
    w_mlp1 = jax.random.normal(ks[5], (mlp_hidden, embed_dim), jnp.float32) * 0.05
    b_mlp1 = jax.random.normal(ks[6], (mlp_hidden,), jnp.float32) * 0.05
    w_mlp2 = jax.random.normal(ks[7], (embed_dim, mlp_hidden), jnp.float32) * 0.05
    b_mlp2 = jax.random.normal(ks[8], (embed_dim,), jnp.float32) * 0.05
    gamma1 = 1.0 + 0.1 * jax.random.normal(ks[9], (embed_dim,), jnp.float32)
    beta1 = 0.05 * jax.random.normal(ks[10], (embed_dim,), jnp.float32)
    gamma2 = 1.0 + 0.1 * jax.random.normal(ks[11], (embed_dim,), jnp.float32)
    beta2 = 0.05 * jax.random.normal(ks[12], (embed_dim,), jnp.float32)

    out = transformer_block(x, gamma1, beta1, wqkv, bqkv, wproj, bproj,
                            gamma2, beta2, w_mlp1, b_mlp1, w_mlp2, b_mlp2,
                            num_heads=num_heads)
    out = jax.block_until_ready(out)

    ref = _reference(x, gamma1, beta1, wqkv, bqkv, wproj, bproj,
                     gamma2, beta2, w_mlp1, b_mlp1, w_mlp2, b_mlp2, num_heads)

    assert out.shape == (B, N, embed_dim)
    # bf16 matmul operands + approx reciprocal + tanh-GELU -> relaxed tolerance.
    assert jnp.allclose(out, ref, atol=2e-2, rtol=2e-2), "mismatch vs reference"

    print("KERNEL_OK")
</pallas_src>

<mosaic_0001>
module attributes {stable_mosaic.version = 11 : i64} {
  func.func @_transformer_block_kernel(%arg0: i32, %arg1: i32, %arg2: memref<1x8x32xbf16, #tpu.memory_space<vmem>>, %arg3: memref<1x8x32xf32, #tpu.memory_space<vmem>>, %arg4: memref<1x32xf32, #tpu.memory_space<vmem>>, %arg5: memref<1x32xf32, #tpu.memory_space<vmem>>, %arg6: memref<32x32xbf16, #tpu.memory_space<vmem>>, %arg7: memref<1x32xf32, #tpu.memory_space<vmem>>, %arg8: memref<32x32xbf16, #tpu.memory_space<vmem>>, %arg9: memref<1x32xf32, #tpu.memory_space<vmem>>, %arg10: memref<32x32xbf16, #tpu.memory_space<vmem>>, %arg11: memref<1x32xf32, #tpu.memory_space<vmem>>, %arg12: memref<32x32xbf16, #tpu.memory_space<vmem>>, %arg13: memref<1x32xf32, #tpu.memory_space<vmem>>, %arg14: memref<1x32xf32, #tpu.memory_space<vmem>>, %arg15: memref<1x32xf32, #tpu.memory_space<vmem>>, %arg16: memref<32x128xbf16, #tpu.memory_space<vmem>>, %arg17: memref<1x128xf32, #tpu.memory_space<vmem>>, %arg18: memref<128x32xbf16, #tpu.memory_space<vmem>>, %arg19: memref<1x32xf32, #tpu.memory_space<vmem>>, %arg20: memref<1x8x32xf32, #tpu.memory_space<vmem>>, %arg21: memref<8x32xbf16, #tpu.memory_space<vmem>>, %arg22: memref<8x32xbf16, #tpu.memory_space<vmem>>, %arg23: memref<8x32xbf16, #tpu.memory_space<vmem>>, %arg24: memref<8x32xbf16, #tpu.memory_space<vmem>>) attributes {dimension_semantics = [#tpu.dimension_semantics<parallel>, #tpu.dimension_semantics<arbitrary>], iteration_bounds = array<i64: 2, 1>, scalar_prefetch = 0 : i64, scratch_operands = 4 : i64, tpu.core_type = #tpu.core_type<tc>, window_params = [{transform_indices = @transform_0, window_bounds = array<i64: 1, 8, 32>}, {transform_indices = @transform_1, window_bounds = array<i64: 1, 8, 32>}, {pipeline_mode = #tpu.pipeline_mode<synchronous>, transform_indices = @transform_2, window_bounds = array<i64: 1, 32>}, {pipeline_mode = #tpu.pipeline_mode<synchronous>, transform_indices = @transform_3, window_bounds = array<i64: 1, 32>}, {pipeline_mode = #tpu.pipeline_mode<synchronous>, transform_indices = @transform_4, window_bounds = array<i64: 32, 32>}, {pipeline_mode = #tpu.pipeline_mode<synchronous>, transform_indices = @transform_5, window_bounds = array<i64: 1, 32>}, {pipeline_mode = #tpu.pipeline_mode<synchronous>, transform_indices = @transform_6, window_bounds = array<i64: 32, 32>}, {pipeline_mode = #tpu.pipeline_mode<synchronous>, transform_indices = @transform_7, window_bounds = array<i64: 1, 32>}, {pipeline_mode = #tpu.pipeline_mode<synchronous>, transform_indices = @transform_8, window_bounds = array<i64: 32, 32>}, {pipeline_mode = #tpu.pipeline_mode<synchronous>, transform_indices = @transform_9, window_bounds = array<i64: 1, 32>}, {pipeline_mode = #tpu.pipeline_mode<synchronous>, transform_indices = @transform_10, window_bounds = array<i64: 32, 32>}, {pipeline_mode = #tpu.pipeline_mode<synchronous>, transform_indices = @transform_11, window_bounds = array<i64: 1, 32>}, {pipeline_mode = #tpu.pipeline_mode<synchronous>, transform_indices = @transform_12, window_bounds = array<i64: 1, 32>}, {pipeline_mode = #tpu.pipeline_mode<synchronous>, transform_indices = @transform_13, window_bounds = array<i64: 1, 32>}, {pipeline_mode = #tpu.pipeline_mode<synchronous>, transform_indices = @transform_14, window_bounds = array<i64: 32, 128>}, {pipeline_mode = #tpu.pipeline_mode<synchronous>, transform_indices = @transform_15, window_bounds = array<i64: 1, 128>}, {pipeline_mode = #tpu.pipeline_mode<synchronous>, transform_indices = @transform_16, window_bounds = array<i64: 128, 32>}, {pipeline_mode = #tpu.pipeline_mode<synchronous>, transform_indices = @transform_17, window_bounds = array<i64: 1, 32>}, {transform_indices = @transform_18, window_bounds = array<i64: 1, 8, 32>}]} {
    %c0_i32 = arith.constant 0 : i32
    %0 = arith.cmpi eq, %arg1, %c0_i32 : i32
    %1 = arith.extui %0 : i1 to i32
    %c0_i32_0 = arith.constant 0 : i32
    %2 = arith.cmpi ne, %1, %c0_i32_0 : i32
    scf.if %2 {
      %c0_78 = arith.constant 0 : index
      %c0_79 = arith.constant 0 : index
      %c0_80 = arith.constant 0 : index
      %160 = vector.load %arg2[%c0_78, %c0_79, %c0_80] : memref<1x8x32xbf16, #tpu.memory_space<vmem>>, vector<1x8x32xbf16>
      %161 = vector.shape_cast %160 : vector<1x8x32xbf16> to vector<8x32xbf16>
      %162 = arith.extf %161 : vector<8x32xbf16> to vector<8x32xf32>
      %c0_81 = arith.constant 0 : index
      %c0_82 = arith.constant 0 : index
      %163 = vector.load %arg4[%c0_81, %c0_82] : memref<1x32xf32, #tpu.memory_space<vmem>>, vector<1x32xf32>
      %164 = vector.shape_cast %163 : vector<1x32xf32> to vector<32xf32>
      %c0_83 = arith.constant 0 : index
      %c0_84 = arith.constant 0 : index
      %165 = vector.load %arg5[%c0_83, %c0_84] : memref<1x32xf32, #tpu.memory_space<vmem>>, vector<1x32xf32>
      %166 = vector.shape_cast %165 : vector<1x32xf32> to vector<32xf32>
      %cst_85 = arith.constant dense<0.000000e+00> : vector<8xf32>
      %167 = vector.multi_reduction <add>, %162, %cst_85 [1] : vector<8x32xf32> to vector<8xf32>
      %168 = vector.shape_cast %167 : vector<8xf32> to vector<8x1xf32>
      %cst_86 = arith.constant 3.200000e+01 : f32
      %169 = vector.broadcast %cst_86 : f32 to vector<8x1xf32>
      %170 = arith.divf %168, %169 : vector<8x1xf32>
      %171 = vector.broadcast %170 : vector<8x1xf32> to vector<8x32xf32>
      %172 = arith.subf %162, %171 : vector<8x32xf32>
      %173 = arith.mulf %172, %172 : vector<8x32xf32>
      %cst_87 = arith.constant dense<0.000000e+00> : vector<8xf32>
      %174 = vector.multi_reduction <add>, %173, %cst_87 [1] : vector<8x32xf32> to vector<8xf32>
      %175 = vector.shape_cast %174 : vector<8xf32> to vector<8x1xf32>
      %cst_88 = arith.constant 3.200000e+01 : f32
      %176 = vector.broadcast %cst_88 : f32 to vector<8x1xf32>
      %177 = arith.divf %175, %176 : vector<8x1xf32>
      %cst_89 = arith.constant 9.99999974E-6 : f32
      %178 = vector.broadcast %cst_89 : f32 to vector<8x1xf32>
      %179 = arith.addf %177, %178 : vector<8x1xf32>
      %180 = math.rsqrt %179 : vector<8x1xf32>
      %181 = vector.broadcast %180 : vector<8x1xf32> to vector<8x32xf32>
      %182 = arith.mulf %172, %181 : vector<8x32xf32>
      %183 = vector.shape_cast %164 : vector<32xf32> to vector<1x32xf32>
      %184 = vector.broadcast %183 : vector<1x32xf32> to vector<8x32xf32>
      %185 = arith.mulf %182, %184 : vector<8x32xf32>
      %186 = vector.shape_cast %166 : vector<32xf32> to vector<1x32xf32>
      %187 = vector.broadcast %186 : vector<1x32xf32> to vector<8x32xf32>
      %188 = arith.addf %185, %187 : vector<8x32xf32>
      %189 = arith.truncf %188 : vector<8x32xf32> to vector<8x32xbf16>
      %c0_90 = arith.constant 0 : index
      %c0_91 = arith.constant 0 : index
      %190 = vector.load %arg21[%c0_90, %c0_91] : memref<8x32xbf16, #tpu.memory_space<vmem>>, vector<8x32xbf16>
      tpu.vector_store %arg21[%c0_90, %c0_91], %189 {strides = array<i32>} : memref<8x32xbf16, #tpu.memory_space<vmem>>, vector<8x32xbf16>,
      %c0_92 = arith.constant 0 : index
      %c0_93 = arith.constant 0 : index
      %191 = vector.load %arg8[%c0_92, %c0_93] : memref<32x32xbf16, #tpu.memory_space<vmem>>, vector<32x32xbf16>
      %cst_94 = arith.constant dense<0.000000e+00> : vector<8x32xf32>
      %192 = tpu.matmul %189, %191, %cst_94 {dimension_numbers = #tpu.dot_dimension_numbers<[1], [0], [0], [1], [0, 0, 1, 1], [], []>} : vector<8x32xbf16>, vector<32x32xbf16>, vector<8x32xf32> -> vector<8x32xf32>
      %c0_95 = arith.constant 0 : index
      %c0_96 = arith.constant 0 : index
      %193 = vector.load %arg9[%c0_95, %c0_96] : memref<1x32xf32, #tpu.memory_space<vmem>>, vector<1x32xf32>
      %194 = vector.shape_cast %193 : vector<1x32xf32> to vector<32xf32>
      %195 = vector.shape_cast %194 : vector<32xf32> to vector<1x32xf32>
      %196 = vector.broadcast %195 : vector<1x32xf32> to vector<8x32xf32>
      %197 = arith.addf %192, %196 : vector<8x32xf32>
      %c0_97 = arith.constant 0 : index
      %c0_98 = arith.constant 0 : index
      %198 = vector.load %arg10[%c0_97, %c0_98] : memref<32x32xbf16, #tpu.memory_space<vmem>>, vector<32x32xbf16>
      %cst_99 = arith.constant dense<0.000000e+00> : vector<8x32xf32>
      %199 = tpu.matmul %189, %198, %cst_99 {dimension_numbers = #tpu.dot_dimension_numbers<[1], [0], [0], [1], [0, 0, 1, 1], [], []>} : vector<8x32xbf16>, vector<32x32xbf16>, vector<8x32xf32> -> vector<8x32xf32>
      %c0_100 = arith.constant 0 : index
      %c0_101 = arith.constant 0 : index
      %200 = vector.load %arg11[%c0_100, %c0_101] : memref<1x32xf32, #tpu.memory_space<vmem>>, vector<1x32xf32>
      %201 = vector.shape_cast %200 : vector<1x32xf32> to vector<32xf32>
      %202 = vector.shape_cast %201 : vector<32xf32> to vector<1x32xf32>
      %203 = vector.broadcast %202 : vector<1x32xf32> to vector<8x32xf32>
      %204 = arith.addf %199, %203 : vector<8x32xf32>
      %205 = arith.truncf %197 : vector<8x32xf32> to vector<8x32xbf16>
      %c0_102 = arith.constant 0 : index
      %c0_103 = arith.constant 0 : index
      %206 = vector.load %arg22[%c0_102, %c0_103] : memref<8x32xbf16, #tpu.memory_space<vmem>>, vector<8x32xbf16>
      tpu.vector_store %arg22[%c0_102, %c0_103], %205 {strides = array<i32>} : memref<8x32xbf16, #tpu.memory_space<vmem>>, vector<8x32xbf16>,
      %207 = arith.truncf %204 : vector<8x32xf32> to vector<8x32xbf16>
      %c0_104 = arith.constant 0 : index
      %c0_105 = arith.constant 0 : index
      %208 = vector.load %arg23[%c0_104, %c0_105] : memref<8x32xbf16, #tpu.memory_space<vmem>>, vector<8x32xbf16>
      tpu.vector_store %arg23[%c0_104, %c0_105], %207 {strides = array<i32>} : memref<8x32xbf16, #tpu.memory_space<vmem>>, vector<8x32xbf16>,
    } else {
    }
    %c0 = arith.constant 0 : index
    %c0_1 = arith.constant 0 : index
    %c0_2 = arith.constant 0 : index
    %3 = vector.load %arg3[%c0, %c0_1, %c0_2] : memref<1x8x32xf32, #tpu.memory_space<vmem>>, vector<1x8x32xf32>
    %4 = vector.shape_cast %3 : vector<1x8x32xf32> to vector<8x32xf32>
    %c8_i32 = arith.constant 8 : i32
    %5 = arith.muli %arg1, %c8_i32 : i32
    %6 = tpu.assume_multiple %5, 8 : i32
    %7 = arith.index_cast %6 : i32 to index
    %c0_3 = arith.constant 0 : index
    %8 = vector.load %arg21[%7, %c0_3] : memref<8x32xbf16, #tpu.memory_space<vmem>>, vector<8x32xbf16>
    %c0_4 = arith.constant 0 : index
    %c0_5 = arith.constant 0 : index
    %9 = vector.load %arg6[%c0_4, %c0_5] : memref<32x32xbf16, #tpu.memory_space<vmem>>, vector<32x32xbf16>
    %cst = arith.constant dense<0.000000e+00> : vector<8x32xf32>
    %10 = tpu.matmul %8, %9, %cst {dimension_numbers = #tpu.dot_dimension_numbers<[1], [0], [0], [1], [0, 0, 1, 1], [], []>} : vector<8x32xbf16>, vector<32x32xbf16>, vector<8x32xf32> -> vector<8x32xf32>
    %c0_6 = arith.constant 0 : index
    %c0_7 = arith.constant 0 : index
    %11 = vector.load %arg7[%c0_6, %c0_7] : memref<1x32xf32, #tpu.memory_space<vmem>>, vector<1x32xf32>
    %12 = vector.shape_cast %11 : vector<1x32xf32> to vector<32xf32>
    %13 = vector.shape_cast %12 : vector<32xf32> to vector<1x32xf32>
    %14 = vector.broadcast %13 : vector<1x32xf32> to vector<8x32xf32>
    %15 = arith.addf %10, %14 : vector<8x32xf32>
    %16 = vector.extract_strided_slice %15 {offsets = [0, 0], sizes = [8, 8], strides = [1, 1]} : vector<8x32xf32> to vector<8x8xf32>
    %17 = arith.truncf %16 : vector<8x8xf32> to vector<8x8xbf16>
    %c0_8 = arith.constant 0 : index
    %c0_9 = arith.constant 0 : index
    %18 = vector.load %arg22[%c0_8, %c0_9] : memref<8x32xbf16, #tpu.memory_space<vmem>>, vector<8x8xbf16>
    %c0_10 = arith.constant 0 : index
    %c0_11 = arith.constant 0 : index
    %19 = vector.load %arg23[%c0_10, %c0_11] : memref<8x32xbf16, #tpu.memory_space<vmem>>, vector<8x8xbf16>
    %cst_12 = arith.constant dense<0.000000e+00> : vector<8x8xf32>
    %20 = tpu.matmul %17, %18, %cst_12 {dimension_numbers = #tpu.dot_dimension_numbers<[1], [1], [0], [0], [0, 0, 1, 0], [], []>} : vector<8x8xbf16>, vector<8x8xbf16>, vector<8x8xf32> -> vector<8x8xf32>
    %cst_13 = arith.constant dense<0xFF800000> : vector<8xf32>
    %21 = vector.multi_reduction <maximumf>, %20, %cst_13 [1] : vector<8x8xf32> to vector<8xf32>
    %22 = vector.shape_cast %21 : vector<8xf32> to vector<8x1xf32>
    %23 = vector.broadcast %22 : vector<8x1xf32> to vector<8x8xf32>
    %24 = arith.subf %20, %23 : vector<8x8xf32>
    %25 = math.exp %24 : vector<8x8xf32>
    %cst_14 = arith.constant dense<0.000000e+00> : vector<8xf32>
    %26 = vector.multi_reduction <add>, %25, %cst_14 [1] : vector<8x8xf32> to vector<8xf32>
    %27 = vector.shape_cast %26 : vector<8xf32> to vector<8x1xf32>
    %28 = tpu.reciprocal %27 {approx = true} : vector<8x1xf32> -> vector<8x1xf32>
    %29 = vector.broadcast %28 : vector<8x1xf32> to vector<8x8xf32>
    %30 = arith.mulf %25, %29 : vector<8x8xf32>
    %31 = arith.truncf %30 : vector<8x8xf32> to vector<8x8xbf16>
    %cst_15 = arith.constant dense<0.000000e+00> : vector<8x8xf32>
    %32 = tpu.matmul %31, %19, %cst_15 {dimension_numbers = #tpu.dot_dimension_numbers<[1], [0], [0], [1], [0, 0, 1, 1], [], []>} : vector<8x8xbf16>, vector<8x8xbf16>, vector<8x8xf32> -> vector<8x8xf32>
    %33 = arith.truncf %32 : vector<8x8xf32> to vector<8x8xbf16>
    %c0_16 = arith.constant 0 : index
    %c0_17 = arith.constant 0 : index
    %34 = vector.load %arg24[%c0_16, %c0_17] : memref<8x32xbf16, #tpu.memory_space<vmem>>, vector<8x8xbf16>
    tpu.vector_store %arg24[%c0_16, %c0_17], %33 {strides = array<i32>} : memref<8x32xbf16, #tpu.memory_space<vmem>>, vector<8x8xbf16>,
    %35 = vector.extract_strided_slice %15 {offsets = [0, 8], sizes = [8, 8], strides = [1, 1]} : vector<8x32xf32> to vector<8x8xf32>
    %36 = arith.truncf %35 : vector<8x8xf32> to vector<8x8xbf16>
    %c0_18 = arith.constant 0 : index
    %c8 = arith.constant 8 : index
    %37 = vector.load %arg22[%c0_18, %c8] : memref<8x32xbf16, #tpu.memory_space<vmem>>, vector<8x8xbf16>
    %c0_19 = arith.constant 0 : index
    %c8_20 = arith.constant 8 : index
    %38 = vector.load %arg23[%c0_19, %c8_20] : memref<8x32xbf16, #tpu.memory_space<vmem>>, vector<8x8xbf16>
    %cst_21 = arith.constant dense<0.000000e+00> : vector<8x8xf32>
    %39 = tpu.matmul %36, %37, %cst_21 {dimension_numbers = #tpu.dot_dimension_numbers<[1], [1], [0], [0], [0, 0, 1, 0], [], []>} : vector<8x8xbf16>, vector<8x8xbf16>, vector<8x8xf32> -> vector<8x8xf32>
    %cst_22 = arith.constant dense<0xFF800000> : vector<8xf32>
    %40 = vector.multi_reduction <maximumf>, %39, %cst_22 [1] : vector<8x8xf32> to vector<8xf32>
    %41 = vector.shape_cast %40 : vector<8xf32> to vector<8x1xf32>
    %42 = vector.broadcast %41 : vector<8x1xf32> to vector<8x8xf32>
    %43 = arith.subf %39, %42 : vector<8x8xf32>
    %44 = math.exp %43 : vector<8x8xf32>
    %cst_23 = arith.constant dense<0.000000e+00> : vector<8xf32>
    %45 = vector.multi_reduction <add>, %44, %cst_23 [1] : vector<8x8xf32> to vector<8xf32>
    %46 = vector.shape_cast %45 : vector<8xf32> to vector<8x1xf32>
    %47 = tpu.reciprocal %46 {approx = true} : vector<8x1xf32> -> vector<8x1xf32>
    %48 = vector.broadcast %47 : vector<8x1xf32> to vector<8x8xf32>
    %49 = arith.mulf %44, %48 : vector<8x8xf32>
    %50 = arith.truncf %49 : vector<8x8xf32> to vector<8x8xbf16>
    %cst_24 = arith.constant dense<0.000000e+00> : vector<8x8xf32>
    %51 = tpu.matmul %50, %38, %cst_24 {dimension_numbers = #tpu.dot_dimension_numbers<[1], [0], [0], [1], [0, 0, 1, 1], [], []>} : vector<8x8xbf16>, vector<8x8xbf16>, vector<8x8xf32> -> vector<8x8xf32>
    %52 = arith.truncf %51 : vector<8x8xf32> to vector<8x8xbf16>
    %c0_25 = arith.constant 0 : index
    %c8_26 = arith.constant 8 : index
    %53 = vector.load %arg24[%c0_25, %c8_26] : memref<8x32xbf16, #tpu.memory_space<vmem>>, vector<8x8xbf16>
    tpu.vector_store %arg24[%c0_25, %c8_26], %52 {strides = array<i32>} : memref<8x32xbf16, #tpu.memory_space<vmem>>, vector<8x8xbf16>,
    %54 = vector.extract_strided_slice %15 {offsets = [0, 16], sizes = [8, 8], strides = [1, 1]} : vector<8x32xf32> to vector<8x8xf32>
    %55 = arith.truncf %54 : vector<8x8xf32> to vector<8x8xbf16>
    %c0_27 = arith.constant 0 : index
    %c16 = arith.constant 16 : index
    %56 = vector.load %arg22[%c0_27, %c16] : memref<8x32xbf16, #tpu.memory_space<vmem>>, vector<8x8xbf16>
    %c0_28 = arith.constant 0 : index
    %c16_29 = arith.constant 16 : index
    %57 = vector.load %arg23[%c0_28, %c16_29] : memref<8x32xbf16, #tpu.memory_space<vmem>>, vector<8x8xbf16>
    %cst_30 = arith.constant dense<0.000000e+00> : vector<8x8xf32>
    %58 = tpu.matmul %55, %56, %cst_30 {dimension_numbers = #tpu.dot_dimension_numbers<[1], [1], [0], [0], [0, 0, 1, 0], [], []>} : vector<8x8xbf16>, vector<8x8xbf16>, vector<8x8xf32> -> vector<8x8xf32>
    %cst_31 = arith.constant dense<0xFF800000> : vector<8xf32>
    %59 = vector.multi_reduction <maximumf>, %58, %cst_31 [1] : vector<8x8xf32> to vector<8xf32>
    %60 = vector.shape_cast %59 : vector<8xf32> to vector<8x1xf32>
    %61 = vector.broadcast %60 : vector<8x1xf32> to vector<8x8xf32>
    %62 = arith.subf %58, %61 : vector<8x8xf32>
    %63 = math.exp %62 : vector<8x8xf32>
    %cst_32 = arith.constant dense<0.000000e+00> : vector<8xf32>
    %64 = vector.multi_reduction <add>, %63, %cst_32 [1] : vector<8x8xf32> to vector<8xf32>
    %65 = vector.shape_cast %64 : vector<8xf32> to vector<8x1xf32>
    %66 = tpu.reciprocal %65 {approx = true} : vector<8x1xf32> -> vector<8x1xf32>
    %67 = vector.broadcast %66 : vector<8x1xf32> to vector<8x8xf32>
    %68 = arith.mulf %63, %67 : vector<8x8xf32>
    %69 = arith.truncf %68 : vector<8x8xf32> to vector<8x8xbf16>
    %cst_33 = arith.constant dense<0.000000e+00> : vector<8x8xf32>
    %70 = tpu.matmul %69, %57, %cst_33 {dimension_numbers = #tpu.dot_dimension_numbers<[1], [0], [0], [1], [0, 0, 1, 1], [], []>} : vector<8x8xbf16>, vector<8x8xbf16>, vector<8x8xf32> -> vector<8x8xf32>
    %71 = arith.truncf %70 : vector<8x8xf32> to vector<8x8xbf16>
    %c0_34 = arith.constant 0 : index
    %c16_35 = arith.constant 16 : index
    %72 = vector.load %arg24[%c0_34, %c16_35] : memref<8x32xbf16, #tpu.memory_space<vmem>>, vector<8x8xbf16>
    tpu.vector_store %arg24[%c0_34, %c16_35], %71 {strides = array<i32>} : memref<8x32xbf16, #tpu.memory_space<vmem>>, vector<8x8xbf16>,
    %73 = vector.extract_strided_slice %15 {offsets = [0, 24], sizes = [8, 8], strides = [1, 1]} : vector<8x32xf32> to vector<8x8xf32>
    %74 = arith.truncf %73 : vector<8x8xf32> to vector<8x8xbf16>
    %c0_36 = arith.constant 0 : index
    %c24 = arith.constant 24 : index
    %75 = vector.load %arg22[%c0_36, %c24] : memref<8x32xbf16, #tpu.memory_space<vmem>>, vector<8x8xbf16>
    %c0_37 = arith.constant 0 : index
    %c24_38 = arith.constant 24 : index
    %76 = vector.load %arg23[%c0_37, %c24_38] : memref<8x32xbf16, #tpu.memory_space<vmem>>, vector<8x8xbf16>
    %cst_39 = arith.constant dense<0.000000e+00> : vector<8x8xf32>
    %77 = tpu.matmul %74, %75, %cst_39 {dimension_numbers = #tpu.dot_dimension_numbers<[1], [1], [0], [0], [0, 0, 1, 0], [], []>} : vector<8x8xbf16>, vector<8x8xbf16>, vector<8x8xf32> -> vector<8x8xf32>
    %cst_40 = arith.constant dense<0xFF800000> : vector<8xf32>
    %78 = vector.multi_reduction <maximumf>, %77, %cst_40 [1] : vector<8x8xf32> to vector<8xf32>
    %79 = vector.shape_cast %78 : vector<8xf32> to vector<8x1xf32>
    %80 = vector.broadcast %79 : vector<8x1xf32> to vector<8x8xf32>
    %81 = arith.subf %77, %80 : vector<8x8xf32>
    %82 = math.exp %81 : vector<8x8xf32>
    %cst_41 = arith.constant dense<0.000000e+00> : vector<8xf32>
    %83 = vector.multi_reduction <add>, %82, %cst_41 [1] : vector<8x8xf32> to vector<8xf32>
    %84 = vector.shape_cast %83 : vector<8xf32> to vector<8x1xf32>
    %85 = tpu.reciprocal %84 {approx = true} : vector<8x1xf32> -> vector<8x1xf32>
    %86 = vector.broadcast %85 : vector<8x1xf32> to vector<8x8xf32>
    %87 = arith.mulf %82, %86 : vector<8x8xf32>
    %88 = arith.truncf %87 : vector<8x8xf32> to vector<8x8xbf16>
    %cst_42 = arith.constant dense<0.000000e+00> : vector<8x8xf32>
    %89 = tpu.matmul %88, %76, %cst_42 {dimension_numbers = #tpu.dot_dimension_numbers<[1], [0], [0], [1], [0, 0, 1, 1], [], []>} : vector<8x8xbf16>, vector<8x8xbf16>, vector<8x8xf32> -> vector<8x8xf32>
    %90 = arith.truncf %89 : vector<8x8xf32> to vector<8x8xbf16>
    %c0_43 = arith.constant 0 : index
    %c24_44 = arith.constant 24 : index
    %91 = vector.load %arg24[%c0_43, %c24_44] : memref<8x32xbf16, #tpu.memory_space<vmem>>, vector<8x8xbf16>
    tpu.vector_store %arg24[%c0_43, %c24_44], %90 {strides = array<i32>} : memref<8x32xbf16, #tpu.memory_space<vmem>>, vector<8x8xbf16>,
    %c0_45 = arith.constant 0 : index
    %c0_46 = arith.constant 0 : index
    %92 = vector.load %arg24[%c0_45, %c0_46] : memref<8x32xbf16, #tpu.memory_space<vmem>>, vector<8x32xbf16>
    %c0_47 = arith.constant 0 : index
    %c0_48 = arith.constant 0 : index
    %93 = vector.load %arg12[%c0_47, %c0_48] : memref<32x32xbf16, #tpu.memory_space<vmem>>, vector<32x32xbf16>
    %cst_49 = arith.constant dense<0.000000e+00> : vector<8x32xf32>
    %94 = tpu.matmul %92, %93, %cst_49 {dimension_numbers = #tpu.dot_dimension_numbers<[1], [0], [0], [1], [0, 0, 1, 1], [], []>} : vector<8x32xbf16>, vector<32x32xbf16>, vector<8x32xf32> -> vector<8x32xf32>
    %c0_50 = arith.constant 0 : index
    %c0_51 = arith.constant 0 : index
    %95 = vector.load %arg13[%c0_50, %c0_51] : memref<1x32xf32, #tpu.memory_space<vmem>>, vector<1x32xf32>
    %96 = vector.shape_cast %95 : vector<1x32xf32> to vector<32xf32>
    %97 = vector.shape_cast %96 : vector<32xf32> to vector<1x32xf32>
    %98 = vector.broadcast %97 : vector<1x32xf32> to vector<8x32xf32>
    %99 = arith.addf %94, %98 : vector<8x32xf32>
    %100 = arith.addf %4, %99 : vector<8x32xf32>
    %c0_52 = arith.constant 0 : index
    %c0_53 = arith.constant 0 : index
    %101 = vector.load %arg14[%c0_52, %c0_53] : memref<1x32xf32, #tpu.memory_space<vmem>>, vector<1x32xf32>
    %102 = vector.shape_cast %101 : vector<1x32xf32> to vector<32xf32>
    %c0_54 = arith.constant 0 : index
    %c0_55 = arith.constant 0 : index
    %103 = vector.load %arg15[%c0_54, %c0_55] : memref<1x32xf32, #tpu.memory_space<vmem>>, vector<1x32xf32>
    %104 = vector.shape_cast %103 : vector<1x32xf32> to vector<32xf32>
    %cst_56 = arith.constant dense<0.000000e+00> : vector<8xf32>
    %105 = vector.multi_reduction <add>, %100, %cst_56 [1] : vector<8x32xf32> to vector<8xf32>
    %106 = vector.shape_cast %105 : vector<8xf32> to vector<8x1xf32>
    %cst_57 = arith.constant 3.200000e+01 : f32
    %107 = vector.broadcast %cst_57 : f32 to vector<8x1xf32>
    %108 = arith.divf %106, %107 : vector<8x1xf32>
    %109 = vector.broadcast %108 : vector<8x1xf32> to vector<8x32xf32>
    %110 = arith.subf %100, %109 : vector<8x32xf32>
    %111 = arith.mulf %110, %110 : vector<8x32xf32>
    %cst_58 = arith.constant dense<0.000000e+00> : vector<8xf32>
    %112 = vector.multi_reduction <add>, %111, %cst_58 [1] : vector<8x32xf32> to vector<8xf32>
    %113 = vector.shape_cast %112 : vector<8xf32> to vector<8x1xf32>
    %cst_59 = arith.constant 3.200000e+01 : f32
    %114 = vector.broadcast %cst_59 : f32 to vector<8x1xf32>
    %115 = arith.divf %113, %114 : vector<8x1xf32>
    %cst_60 = arith.constant 9.99999974E-6 : f32
    %116 = vector.broadcast %cst_60 : f32 to vector<8x1xf32>
    %117 = arith.addf %115, %116 : vector<8x1xf32>
    %118 = math.rsqrt %117 : vector<8x1xf32>
    %119 = vector.broadcast %118 : vector<8x1xf32> to vector<8x32xf32>
    %120 = arith.mulf %110, %119 : vector<8x32xf32>
    %121 = vector.shape_cast %102 : vector<32xf32> to vector<1x32xf32>
    %122 = vector.broadcast %121 : vector<1x32xf32> to vector<8x32xf32>
    %123 = arith.mulf %120, %122 : vector<8x32xf32>
    %124 = vector.shape_cast %104 : vector<32xf32> to vector<1x32xf32>
    %125 = vector.broadcast %124 : vector<1x32xf32> to vector<8x32xf32>
    %126 = arith.addf %123, %125 : vector<8x32xf32>
    %127 = arith.truncf %126 : vector<8x32xf32> to vector<8x32xbf16>
    %c0_61 = arith.constant 0 : index
    %c0_62 = arith.constant 0 : index
    %128 = vector.load %arg16[%c0_61, %c0_62] : memref<32x128xbf16, #tpu.memory_space<vmem>>, vector<32x128xbf16>
    %cst_63 = arith.constant dense<0.000000e+00> : vector<8x128xf32>
    %129 = tpu.matmul %127, %128, %cst_63 {dimension_numbers = #tpu.dot_dimension_numbers<[1], [0], [0], [1], [0, 0, 1, 1], [], []>} : vector<8x32xbf16>, vector<32x128xbf16>, vector<8x128xf32> -> vector<8x128xf32>
    %c0_64 = arith.constant 0 : index
    %c0_65 = arith.constant 0 : index
    %130 = vector.load %arg17[%c0_64, %c0_65] : memref<1x128xf32, #tpu.memory_space<vmem>>, vector<1x128xf32>
    %131 = vector.shape_cast %130 : vector<1x128xf32> to vector<128xf32>
    %132 = vector.shape_cast %131 : vector<128xf32> to vector<1x128xf32>
    %133 = vector.broadcast %132 : vector<1x128xf32> to vector<8x128xf32>
    %134 = arith.addf %129, %133 : vector<8x128xf32>
    %cst_66 = arith.constant 4.471500e-02 : f32
    %135 = vector.broadcast %cst_66 : f32 to vector<8x128xf32>
    %136 = arith.mulf %135, %134 : vector<8x128xf32>
    %137 = arith.mulf %136, %134 : vector<8x128xf32>
    %138 = arith.mulf %137, %134 : vector<8x128xf32>
    %139 = arith.addf %134, %138 : vector<8x128xf32>
    %cst_67 = arith.constant 0.797884583 : f32
    %140 = vector.broadcast %cst_67 : f32 to vector<8x128xf32>
    %141 = arith.mulf %140, %139 : vector<8x128xf32>
    %142 = math.tanh %141 : vector<8x128xf32>
    %cst_68 = arith.constant 5.000000e-01 : f32
    %143 = vector.broadcast %cst_68 : f32 to vector<8x128xf32>
    %144 = arith.mulf %143, %134 : vector<8x128xf32>
    %cst_69 = arith.constant 1.000000e+00 : f32
    %145 = vector.broadcast %cst_69 : f32 to vector<8x128xf32>
    %146 = arith.addf %145, %142 : vector<8x128xf32>
    %147 = arith.mulf %144, %146 : vector<8x128xf32>
    %148 = arith.truncf %147 : vector<8x128xf32> to vector<8x128xbf16>
    %c0_70 = arith.constant 0 : index
    %c0_71 = arith.constant 0 : index
    %149 = vector.load %arg18[%c0_70, %c0_71] : memref<128x32xbf16, #tpu.memory_space<vmem>>, vector<128x32xbf16>
    %cst_72 = arith.constant dense<0.000000e+00> : vector<8x32xf32>
    %150 = tpu.matmul %148, %149, %cst_72 {dimension_numbers = #tpu.dot_dimension_numbers<[1], [0], [0], [1], [0, 0, 1, 1], [], []>} : vector<8x128xbf16>, vector<128x32xbf16>, vector<8x32xf32> -> vector<8x32xf32>
    %c0_73 = arith.constant 0 : index
    %c0_74 = arith.constant 0 : index
    %151 = vector.load %arg19[%c0_73, %c0_74] : memref<1x32xf32, #tpu.memory_space<vmem>>, vector<1x32xf32>
    %152 = vector.shape_cast %151 : vector<1x32xf32> to vector<32xf32>
    %153 = vector.shape_cast %152 : vector<32xf32> to vector<1x32xf32>
    %154 = vector.broadcast %153 : vector<1x32xf32> to vector<8x32xf32>
    %155 = arith.addf %150, %154 : vector<8x32xf32>
    %156 = arith.addf %100, %155 : vector<8x32xf32>
    %c0_75 = arith.constant 0 : index
    %c0_76 = arith.constant 0 : index
    %c0_77 = arith.constant 0 : index
    %157 = vector.load %arg20[%c0_75, %c0_76, %c0_77] : memref<1x8x32xf32, #tpu.memory_space<vmem>>, vector<1x8x32xf32>
    %158 = vector.shape_cast %157 : vector<1x8x32xf32> to vector<8x32xf32>
    %159 = vector.shape_cast %156 : vector<8x32xf32> to vector<1x8x32xf32>
    tpu.vector_store %arg20[%c0_75, %c0_76, %c0_77], %159 {strides = array<i32>} : memref<1x8x32xf32, #tpu.memory_space<vmem>>, vector<1x8x32xf32>,
    return
  }
  func.func @transform_0(%arg0: i32, %arg1: i32) -> (i32, i32, i32) {
    %c0_i32 = arith.constant 0 : i32
    %c0_i32_0 = arith.constant 0 : i32
    %c0_i32_1 = arith.constant 0 : i32
    return %arg0, %c0_i32, %c0_i32_0 : i32, i32, i32
  }
  func.func @transform_1(%arg0: i32, %arg1: i32) -> (i32, i32, i32) {
    %c0_i32 = arith.constant 0 : i32
    %c0_i32_0 = arith.constant 0 : i32
    return %arg0, %arg1, %c0_i32 : i32, i32, i32
  }
  func.func @transform_2(%arg0: i32, %arg1: i32) -> (i32, i32) {
    %c0_i32 = arith.constant 0 : i32
    %c0_i32_0 = arith.constant 0 : i32
    %c0_i32_1 = arith.constant 0 : i32
    return %c0_i32, %c0_i32_0 : i32, i32
  }
  func.func @transform_3(%arg0: i32, %arg1: i32) -> (i32, i32) {
    %c0_i32 = arith.constant 0 : i32
    %c0_i32_0 = arith.constant 0 : i32
    %c0_i32_1 = arith.constant 0 : i32
    return %c0_i32, %c0_i32_0 : i32, i32
  }
  func.func @transform_4(%arg0: i32, %arg1: i32) -> (i32, i32) {
    %c0_i32 = arith.constant 0 : i32
    %c0_i32_0 = arith.constant 0 : i32
    %c0_i32_1 = arith.constant 0 : i32
    return %c0_i32, %c0_i32_0 : i32, i32
  }
  func.func @transform_5(%arg0: i32, %arg1: i32) -> (i32, i32) {
    %c0_i32 = arith.constant 0 : i32
    %c0_i32_0 = arith.constant 0 : i32
    %c0_i32_1 = arith.constant 0 : i32
    return %c0_i32, %c0_i32_0 : i32, i32
  }
  func.func @transform_6(%arg0: i32, %arg1: i32) -> (i32, i32) {
    %c0_i32 = arith.constant 0 : i32
    %c0_i32_0 = arith.constant 0 : i32
    %c0_i32_1 = arith.constant 0 : i32
    return %c0_i32, %c0_i32_0 : i32, i32
  }
  func.func @transform_7(%arg0: i32, %arg1: i32) -> (i32, i32) {
    %c0_i32 = arith.constant 0 : i32
    %c0_i32_0 = arith.constant 0 : i32
    %c0_i32_1 = arith.constant 0 : i32
    return %c0_i32, %c0_i32_0 : i32, i32
  }
  func.func @transform_8(%arg0: i32, %arg1: i32) -> (i32, i32) {
    %c0_i32 = arith.constant 0 : i32
    %c0_i32_0 = arith.constant 0 : i32
    %c0_i32_1 = arith.constant 0 : i32
    return %c0_i32, %c0_i32_0 : i32, i32
  }
  func.func @transform_9(%arg0: i32, %arg1: i32) -> (i32, i32) {
    %c0_i32 = arith.constant 0 : i32
    %c0_i32_0 = arith.constant 0 : i32
    %c0_i32_1 = arith.constant 0 : i32
    return %c0_i32, %c0_i32_0 : i32, i32
  }
  func.func @transform_10(%arg0: i32, %arg1: i32) -> (i32, i32) {
    %c0_i32 = arith.constant 0 : i32
    %c0_i32_0 = arith.constant 0 : i32
    %c0_i32_1 = arith.constant 0 : i32
    return %c0_i32, %c0_i32_0 : i32, i32
  }
  func.func @transform_11(%arg0: i32, %arg1: i32) -> (i32, i32) {
    %c0_i32 = arith.constant 0 : i32
    %c0_i32_0 = arith.constant 0 : i32
    %c0_i32_1 = arith.constant 0 : i32
    return %c0_i32, %c0_i32_0 : i32, i32
  }
  func.func @transform_12(%arg0: i32, %arg1: i32) -> (i32, i32) {
    %c0_i32 = arith.constant 0 : i32
    %c0_i32_0 = arith.constant 0 : i32
    %c0_i32_1 = arith.constant 0 : i32
    return %c0_i32, %c0_i32_0 : i32, i32
  }
  func.func @transform_13(%arg0: i32, %arg1: i32) -> (i32, i32) {
    %c0_i32 = arith.constant 0 : i32
    %c0_i32_0 = arith.constant 0 : i32
    %c0_i32_1 = arith.constant 0 : i32
    return %c0_i32, %c0_i32_0 : i32, i32
  }
  func.func @transform_14(%arg0: i32, %arg1: i32) -> (i32, i32) {
    %c0_i32 = arith.constant 0 : i32
    %c0_i32_0 = arith.constant 0 : i32
    %c0_i32_1 = arith.constant 0 : i32
    return %c0_i32, %c0_i32_0 : i32, i32
  }
  func.func @transform_15(%arg0: i32, %arg1: i32) -> (i32, i32) {
    %c0_i32 = arith.constant 0 : i32
    %c0_i32_0 = arith.constant 0 : i32
    %c0_i32_1 = arith.constant 0 : i32
    return %c0_i32, %c0_i32_0 : i32, i32
  }
  func.func @transform_16(%arg0: i32, %arg1: i32) -> (i32, i32) {
    %c0_i32 = arith.constant 0 : i32
    %c0_i32_0 = arith.constant 0 : i32
    %c0_i32_1 = arith.constant 0 : i32
    return %c0_i32, %c0_i32_0 : i32, i32
  }
  func.func @transform_17(%arg0: i32, %arg1: i32) -> (i32, i32) {
    %c0_i32 = arith.constant 0 : i32
    %c0_i32_0 = arith.constant 0 : i32
    %c0_i32_1 = arith.constant 0 : i32
    return %c0_i32, %c0_i32_0 : i32, i32
  }
  func.func @transform_18(%arg0: i32, %arg1: i32) -> (i32, i32, i32) {
    %c0_i32 = arith.constant 0 : i32
    %c0_i32_0 = arith.constant 0 : i32
    return %arg0, %arg1, %c0_i32 : i32, i32, i32
  }
}

</mosaic_0001>

<llo_original>
// kernel: tpu_custom_call.1
$region0: #{tpu_custom_call.1}
  #allocation0 [shape = 'u32[]', space=smem, size = 0x4, offset = 0x4, fixed_abs, tag = 'smem constant byte address 0x4 - core index']
  #allocation1 [shape = 'u32[144,128]{1,0:T(1,128)}', space=vmem, size = 0x12000, scoped, tag = 'internal scratch']
  #allocation2 [shape = 'bf16[8,32]{1,0:T(8,128)(2,1)}', space=vmem, size = 0x800, scoped, tag = 'scratch operand']
  #allocation3 [shape = 'bf16[8,32]{1,0:T(8,128)(2,1)}', space=vmem, size = 0x800, scoped, tag = 'scratch operand']
  #allocation4 [shape = 'bf16[8,32]{1,0:T(8,128)(2,1)}', space=vmem, size = 0x800, scoped, tag = 'scratch operand']
  #allocation5 [shape = 'bf16[8,32]{1,0:T(8,128)(2,1)}', space=vmem, size = 0x800, scoped, tag = 'scratch operand']
  %s0 = inlined_call_operand.hbm [shape: bf16[2,8,32], index: 0, kind: input, shape index: {}]
  %s1 = inlined_call_operand.vmem [shape: f32[2,8,32], index: 1, kind: input, shape index: {}]
  %s2 = inlined_call_operand.vmem [shape: f32[1,32], index: 2, kind: input, shape index: {}]
  %s3 = inlined_call_operand.vmem [shape: f32[1,32], index: 3, kind: input, shape index: {}]
  %s4 = inlined_call_operand.vmem [shape: bf16[32,32], index: 4, kind: input, shape index: {}]
  %s5 = inlined_call_operand.hbm [shape: f32[1,32], index: 5, kind: input, shape index: {}]
  %s6 = inlined_call_operand.vmem [shape: bf16[32,32], index: 6, kind: input, shape index: {}]
  %s7 = inlined_call_operand.hbm [shape: f32[1,32], index: 7, kind: input, shape index: {}]
  %s8 = inlined_call_operand.vmem [shape: bf16[32,32], index: 8, kind: input, shape index: {}]
  %s9 = inlined_call_operand.hbm [shape: f32[1,32], index: 9, kind: input, shape index: {}]
  %s10 = inlined_call_operand.vmem [shape: bf16[32,32], index: 10, kind: input, shape index: {}]
  %s11 = inlined_call_operand.vmem [shape: f32[1,32], index: 11, kind: input, shape index: {}]
  %s12 = inlined_call_operand.vmem [shape: f32[1,32], index: 12, kind: input, shape index: {}]
  %s13 = inlined_call_operand.vmem [shape: f32[1,32], index: 13, kind: input, shape index: {}]
  %s14 = inlined_call_operand.vmem [shape: bf16[32,128], index: 14, kind: input, shape index: {}]
  %s15 = inlined_call_operand.vmem [shape: f32[1,128], index: 15, kind: input, shape index: {}]
  %s16 = inlined_call_operand.vmem [shape: bf16[128,32], index: 16, kind: input, shape index: {}]
  %s17 = inlined_call_operand.vmem [shape: f32[1,32], index: 17, kind: input, shape index: {}]
  %s18 = inlined_call_operand.hbm [shape: f32[2,8,32], index: 18, kind: output, shape index: {}]
  %s19 = sld [smem:[#allocation0]]
  $region125: #{tpu_custom_call.1} parent=0
    _
  %s21 = ssub.s32 1, %s19
  %s22 = scalar_select 0, %s21, %s19
  $region1: #{tpu_custom_call.1} parent=0
    #allocation6 [shape = 'u8[4096]{0}', space=vmem, size = 0x1000, scoped, tag = 'input window, operand 0']
    #allocation7 [shape = 's32[2]{0}', space=sflag, size = 0x8, scoped, tag = 'scoped memory for tpu_custom_call.1']
    #allocation8 [shape = 's32[2]{0}', space=sflag, size = 0x8, scoped, tag = 'scoped memory for tpu_custom_call.1']
    #allocation9 [shape = 'u8[512]{0}', space=vmem, size = 0x400, scoped, tag = 'input window, operand 5, single buffered']
    #allocation10 [shape = 's32[1]{0}', space=sflag, size = 0x4, scoped, tag = 'scoped memory for tpu_custom_call.1']
    #allocation11 [shape = 'u8[512]{0}', space=vmem, size = 0x400, scoped, tag = 'input window, operand 7, single buffered']
    #allocation12 [shape = 'u8[512]{0}', space=vmem, size = 0x400, scoped, tag = 'input window, operand 9, single buffered']
    #allocation13 [shape = 's32[1]{0}', space=sflag, size = 0x4, scoped, tag = 'scoped memory for tpu_custom_call.1']
    #allocation14 [shape = 'u8[8192]{0}', space=vmem, size = 0x2000, scoped, tag = 'output window, operand 0']
    %23 = vsyncpa [#allocation7], 0
    %s24 = scalar_lea.sflag [#allocation7], 1
    %25 = vsyncpa %s24, 0
    %26 = vsyncpa [#allocation10], 0
    %27 = vsyncpa [#allocation13], 0
    %28 = vsyncpa [#allocation8], 0
    %s29 = scalar_lea.sflag [#allocation8], 1
    %30 = vsyncpa %s29, 0
    loop: start=0, step=1, limit=4
    $region2: #{tpu_custom_call.1} parent=1 // loop_pre_header
      _
    $region3: #{tpu_custom_call.1} parent=1 // loop_header
      %s32 = sphi 0, %s36
      %p33 = scmp.ge.s32.totalorder %s32, 4
      %s39 = sphi 0, %s51
      %s40 = sphi 0, %s47
      %s41 = sphi 0, %s39
      %s42 = sphi 0, %s40
      %s43 = sphi 0, %s41
      %s44 = sphi 0, %s42
      %s54 = sphi 0, %s56
      %s57 = sphi 0, %s54
      %s58 = sphi 0, %s57
      %s74 = sphi 0, %s58
      %s82 = sphi 0, %s84
      %s85 = sphi 0, %s82
      %s86 = sphi 0, %s85
      %s102 = sphi 0, %s86
      %s106 = sphi 0, %s106
      %s108 = sphi 0, %s106
      %s109 = sphi 0, %s108
      %s123 = sphi 0, %s109
      %s127 = sphi 0, %s127
      %s129 = sphi 0, %s127
      %s130 = sphi 0, %s129
      %s144 = sphi 0, %s130
      %s148 = sphi 0, %s148
      %s150 = sphi 0, %s148
      %s151 = sphi 0, %s150
      %s165 = sphi 0, %s151
      %s169 = sphi 0, %s169
      %s171 = sphi 0, %s169
      %s172 = sphi 0, %s171
      %s186 = sphi 0, %s172
      %s190 = sphi 0, %s190
      %s192 = sphi 0, %s190
      %s193 = sphi 0, %s192
      %s207 = sphi 0, %s193
      %s211 = sphi 0, %s211
      %s213 = sphi 0, %s211
      %s214 = sphi 0, %s213
      %s228 = sphi 0, %s214
      %s232 = sphi 0, %s232
      %s234 = sphi 0, %s232
      %s235 = sphi 0, %s234
      %s249 = sphi 0, %s235
      %s253 = sphi 0, %s253
      %s255 = sphi 0, %s253
      %s256 = sphi 0, %s255
      %s270 = sphi 0, %s256
      %s274 = sphi 0, %s274
      %s276 = sphi 0, %s274
      %s277 = sphi 0, %s276
      %s291 = sphi 0, %s277
      %s295 = sphi 0, %s295
      %s297 = sphi 0, %s295
      %s298 = sphi 0, %s297
      %s312 = sphi 0, %s298
      %s316 = sphi 0, %s316
      %s318 = sphi 0, %s316
      %s319 = sphi 0, %s318
      %s333 = sphi 0, %s319
      %s337 = sphi 0, %s337
      %s339 = sphi 0, %s337
      %s340 = sphi 0, %s339
      %s354 = sphi 0, %s340
      %s358 = sphi 0, %s358
      %s360 = sphi 0, %s358
      %s361 = sphi 0, %s360
      %s375 = sphi 0, %s361
      %s379 = sphi 0, %s379
      %s381 = sphi 0, %s379
      %s382 = sphi 0, %s381
      %s396 = sphi 0, %s382
      %s400 = sphi 0, %s400
      %s402 = sphi 0, %s400
      %s403 = sphi 0, %s402
      %s417 = sphi 0, %s403
      %s421 = sphi 0, %s421
      %s423 = sphi 0, %s421
      %s424 = sphi 0, %s423
      %s438 = sphi 0, %s424
      %s446 = sphi 0, %s448
      %s449 = sphi 0, %s446
      %s450 = sphi 0, %s449
      %s466 = sphi 0, %s450
    $region4: #{tpu_custom_call.1} parent=1 // loop_header_branch
      %35 = sbr.rel (%p33) target = $region8
    $region5: #{tpu_custom_call.1} parent=1 // loop_body
      %s37 = ssub.s32 %s32, 1
      %s38 = ssub.s32 %s32, 2
      %s45 = sadd.s32 1, %s40
      %p46 = scmp.ge.s32.totalorder %s45, 1
      %s47 = scalar_select %p46, 0, %s45
      %s48 = sadd.s32 1, %s39
      %s49 = scalar_select %p46, %s48, %s39
      %p50 = scmp.ge.s32.totalorder %s49, 2
      %s51 = scalar_select %p50, 0, %s49
      %s52 = ssub.s32 %s39, %s51
      %p53 = scmp.eq.s32.totalorder %s52, 0
      %s55 = sadd.s32 %s54, 1
      %s56 = scalar_select %p53, %s54, %s55
      %p59 = pneg %p53
      %p60 = scmp.eq.s32.totalorder %s32, 1
      %p61 = por %p59, %p60
      %p62 = scmp.ne.s32.totalorder %s54, %s57
      %p63 = scmp.eq.s32.totalorder %s32, 0
      %p64 = por %p62, %p63
      %p65 = scmp.ne.s32.totalorder %s54, %s57
      %p66 = scmp.eq.s32.totalorder %s37, 1
      %p67 = por %p65, %p66
      %p68 = scmp.ne.s32.totalorder %s57, %s58
      %p69 = scmp.eq.s32.totalorder %s37, 0
      %p70 = por %p68, %p69
      %p71 = scmp.ne.s32.totalorder %s57, %s58
      %p72 = scmp.eq.s32.totalorder %s38, 1
      %p73 = por %p71, %p72
      %p75 = scmp.ne.s32.totalorder %s58, %s74
      %p76 = scmp.eq.s32.totalorder %s38, 0
      %p77 = por %p75, %p76
      %s78 = ssub.s32 %s39, %s51
      %s79 = ssub.s32 %s40, %s47
      %s80 = sor.u32 %s78, %s79
      %p81 = scmp.eq.s32.totalorder %s80, 0
      %s83 = sadd.s32 %s82, 1
      %s84 = scalar_select %p81, %s82, %s83
      %p87 = pneg %p81
      %p88 = scmp.eq.s32.totalorder %s32, 1
      %p89 = por %p87, %p88
      %p90 = scmp.ne.s32.totalorder %s82, %s85
      %p91 = scmp.eq.s32.totalorder %s32, 0
      %p92 = por %p90, %p91
      %p93 = scmp.ne.s32.totalorder %s82, %s85
      %p94 = scmp.eq.s32.totalorder %s37, 1
      %p95 = por %p93, %p94
      %p96 = scmp.ne.s32.totalorder %s85, %s86
      %p97 = scmp.eq.s32.totalorder %s37, 0
      %p98 = por %p96, %p97
      %p99 = scmp.ne.s32.totalorder %s85, %s86
      %p100 = scmp.eq.s32.totalorder %s38, 1
      %p101 = por %p99, %p100
      %p103 = scmp.ne.s32.totalorder %s86, %s102
      %p104 = scmp.eq.s32.totalorder %s38, 0
      %p105 = por %p103, %p104
      %s107 = sadd.s32 %s106, 1
      %p110 = scmp.eq.s32.totalorder %s32, 1
      %p111 = scmp.ne.s32.totalorder %s106, %s108
      %p112 = scmp.eq.s32.totalorder %s32, 0
      %p113 = por %p111, %p112
      %p114 = scmp.ne.s32.totalorder %s106, %s108
      %p115 = scmp.eq.s32.totalorder %s37, 1
      %p116 = por %p114, %p115
      %p117 = scmp.ne.s32.totalorder %s108, %s109
      %p118 = scmp.eq.s32.totalorder %s37, 0
      %p119 = por %p117, %p118
      %p120 = scmp.ne.s32.totalorder %s108, %s109
      %p121 = scmp.eq.s32.totalorder %s38, 1
      %p122 = por %p120, %p121
      %p124 = scmp.ne.s32.totalorder %s109, %s123
      %p125 = scmp.eq.s32.totalorder %s38, 0
      %p126 = por %p124, %p125
      %s128 = sadd.s32 %s127, 1
      %p131 = scmp.eq.s32.totalorder %s32, 1
      %p132 = scmp.ne.s32.totalorder %s127, %s129
      %p133 = scmp.eq.s32.totalorder %s32, 0
      %p134 = por %p132, %p133
      %p135 = scmp.ne.s32.totalorder %s127, %s129
      %p136 = scmp.eq.s32.totalorder %s37, 1
      %p137 = por %p135, %p136
      %p138 = scmp.ne.s32.totalorder %s129, %s130
      %p139 = scmp.eq.s32.totalorder %s37, 0
      %p140 = por %p138, %p139
      %p141 = scmp.ne.s32.totalorder %s129, %s130
      %p142 = scmp.eq.s32.totalorder %s38, 1
      %p143 = por %p141, %p142
      %p145 = scmp.ne.s32.totalorder %s130, %s144
      %p146 = scmp.eq.s32.totalorder %s38, 0
      %p147 = por %p145, %p146
      %s149 = sadd.s32 %s148, 1
      %p152 = scmp.eq.s32.totalorder %s32, 1
      %p153 = scmp.ne.s32.totalorder %s148, %s150
      %p154 = scmp.eq.s32.totalorder %s32, 0
      %p155 = por %p153, %p154
      %p156 = scmp.ne.s32.totalorder %s148, %s150
      %p157 = scmp.eq.s32.totalorder %s37, 1
      %p158 = por %p156, %p157
      %p159 = scmp.ne.s32.totalorder %s150, %s151
      %p160 = scmp.eq.s32.totalorder %s37, 0
      %p161 = por %p159, %p160
      %p162 = scmp.ne.s32.totalorder %s150, %s151
      %p163 = scmp.eq.s32.totalorder %s38, 1
      %p164 = por %p162, %p163
      %p166 = scmp.ne.s32.totalorder %s151, %s165
      %p167 = scmp.eq.s32.totalorder %s38, 0
      %p168 = por %p166, %p167
      %s170 = sadd.s32 %s169, 1
      %p173 = scmp.eq.s32.totalorder %s32, 1
      %p174 = scmp.ne.s32.totalorder %s169, %s171
      %p175 = scmp.eq.s32.totalorder %s32, 0
      %p176 = por %p174, %p175
      %p177 = scmp.ne.s32.totalorder %s169, %s171
      %p178 = scmp.eq.s32.totalorder %s37, 1
      %p179 = por %p177, %p178
      %p180 = scmp.ne.s32.totalorder %s171, %s172
      %p181 = scmp.eq.s32.totalorder %s37, 0
      %p182 = por %p180, %p181
      %p183 = scmp.ne.s32.totalorder %s171, %s172
      %p184 = scmp.eq.s32.totalorder %s38, 1
      %p185 = por %p183, %p184
      %p187 = scmp.ne.s32.totalorder %s172, %s186
      %p188 = scmp.eq.s32.totalorder %s38, 0
      %p189 = por %p187, %p188
      %s191 = sadd.s32 %s190, 1
      %p194 = scmp.eq.s32.totalorder %s32, 1
      %p195 = scmp.ne.s32.totalorder %s190, %s192
      %p196 = scmp.eq.s32.totalorder %s32, 0
      %p197 = por %p195, %p196
      %p198 = scmp.ne.s32.totalorder %s190, %s192
      %p199 = scmp.eq.s32.totalorder %s37, 1
      %p200 = por %p198, %p199
      %p201 = scmp.ne.s32.totalorder %s192, %s193
      %p202 = scmp.eq.s32.totalorder %s37, 0
      %p203 = por %p201, %p202
      %p204 = scmp.ne.s32.totalorder %s192, %s193
      %p205 = scmp.eq.s32.totalorder %s38, 1
      %p206 = por %p204, %p205
      %p208 = scmp.ne.s32.totalorder %s193, %s207
      %p209 = scmp.eq.s32.totalorder %s38, 0
      %p210 = por %p208, %p209
      %s212 = sadd.s32 %s211, 1
      %p215 = scmp.eq.s32.totalorder %s32, 1
      %p216 = scmp.ne.s32.totalorder %s211, %s213
      %p217 = scmp.eq.s32.totalorder %s32, 0
      %p218 = por %p216, %p217
      %p219 = scmp.ne.s32.totalorder %s211, %s213
      %p220 = scmp.eq.s32.totalorder %s37, 1
      %p221 = por %p219, %p220
      %p222 = scmp.ne.s32.totalorder %s213, %s214
      %p223 = scmp.eq.s32.totalorder %s37, 0
      %p224 = por %p222, %p223
      %p225 = scmp.ne.s32.totalorder %s213, %s214
      %p226 = scmp.eq.s32.totalorder %s38, 1
      %p227 = por %p225, %p226
      %p229 = scmp.ne.s32.totalorder %s214, %s228
      %p230 = scmp.eq.s32.totalorder %s38, 0
      %p231 = por %p229, %p230
      %s233 = sadd.s32 %s232, 1
      %p236 = scmp.eq.s32.totalorder %s32, 1
      %p237 = scmp.ne.s32.totalorder %s232, %s234
      %p238 = scmp.eq.s32.totalorder %s32, 0
      %p239 = por %p237, %p238
      %p240 = scmp.ne.s32.totalorder %s232, %s234
      %p241 = scmp.eq.s32.totalorder %s37, 1
      %p242 = por %p240, %p241
      %p243 = scmp.ne.s32.totalorder %s234, %s235
      %p244 = scmp.eq.s32.totalorder %s37, 0
      %p245 = por %p243, %p244
      %p246 = scmp.ne.s32.totalorder %s234, %s235
      %p247 = scmp.eq.s32.totalorder %s38, 1
      %p248 = por %p246, %p247
      %p250 = scmp.ne.s32.totalorder %s235, %s249
      %p251 = scmp.eq.s32.totalorder %s38, 0
      %p252 = por %p250, %p251
      %s254 = sadd.s32 %s253, 1
      %p257 = scmp.eq.s32.totalorder %s32, 1
      %p258 = scmp.ne.s32.totalorder %s253, %s255
      %p259 = scmp.eq.s32.totalorder %s32, 0
      %p260 = por %p258, %p259
      %p261 = scmp.ne.s32.totalorder %s253, %s255
      %p262 = scmp.eq.s32.totalorder %s37, 1
      %p263 = por %p261, %p262
      %p264 = scmp.ne.s32.totalorder %s255, %s256
      %p265 = scmp.eq.s32.totalorder %s37, 0
      %p266 = por %p264, %p265
      %p267 = scmp.ne.s32.totalorder %s255, %s256
      %p268 = scmp.eq.s32.totalorder %s38, 1
      %p269 = por %p267, %p268
      %p271 = scmp.ne.s32.totalorder %s256, %s270
      %p272 = scmp.eq.s32.totalorder %s38, 0
      %p273 = por %p271, %p272
      %s275 = sadd.s32 %s274, 1
      %p278 = scmp.eq.s32.totalorder %s32, 1
      %p279 = scmp.ne.s32.totalorder %s274, %s276
      %p280 = scmp.eq.s32.totalorder %s32, 0
      %p281 = por %p279, %p280
      %p282 = scmp.ne.s32.totalorder %s274, %s276
      %p283 = scmp.eq.s32.totalorder %s37, 1
      %p284 = por %p282, %p283
      %p285 = scmp.ne.s32.totalorder %s276, %s277
      %p286 = scmp.eq.s32.totalorder %s37, 0
      %p287 = por %p285, %p286
      %p288 = scmp.ne.s32.totalorder %s276, %s277
      %p289 = scmp.eq.s32.totalorder %s38, 1
      %p290 = por %p288, %p289
      %p292 = scmp.ne.s32.totalorder %s277, %s291
      %p293 = scmp.eq.s32.totalorder %s38, 0
      %p294 = por %p292, %p293
      %s296 = sadd.s32 %s295, 1
      %p299 = scmp.eq.s32.totalorder %s32, 1
      %p300 = scmp.ne.s32.totalorder %s295, %s297
      %p301 = scmp.eq.s32.totalorder %s32, 0
      %p302 = por %p300, %p301
      %p303 = scmp.ne.s32.totalorder %s295, %s297
      %p304 = scmp.eq.s32.totalorder %s37, 1
      %p305 = por %p303, %p304
      %p306 = scmp.ne.s32.totalorder %s297, %s298
      %p307 = scmp.eq.s32.totalorder %s37, 0
      %p308 = por %p306, %p307
      %p309 = scmp.ne.s32.totalorder %s297, %s298
      %p310 = scmp.eq.s32.totalorder %s38, 1
      %p311 = por %p309, %p310
      %p313 = scmp.ne.s32.totalorder %s298, %s312
      %p314 = scmp.eq.s32.totalorder %s38, 0
      %p315 = por %p313, %p314
      %s317 = sadd.s32 %s316, 1
      %p320 = scmp.eq.s32.totalorder %s32, 1
      %p321 = scmp.ne.s32.totalorder %s316, %s318
      %p322 = scmp.eq.s32.totalorder %s32, 0
      %p323 = por %p321, %p322
      %p324 = scmp.ne.s32.totalorder %s316, %s318
      %p325 = scmp.eq.s32.totalorder %s37, 1
      %p326 = por %p324, %p325
      %p327 = scmp.ne.s32.totalorder %s318, %s319
      %p328 = scmp.eq.s32.totalorder %s37, 0
      %p329 = por %p327, %p328
      %p330 = scmp.ne.s32.totalorder %s318, %s319
      %p331 = scmp.eq.s32.totalorder %s38, 1
      %p332 = por %p330, %p331
      %p334 = scmp.ne.s32.totalorder %s319, %s333
      %p335 = scmp.eq.s32.totalorder %s38, 0
      %p336 = por %p334, %p335
      %s338 = sadd.s32 %s337, 1
      %p341 = scmp.eq.s32.totalorder %s32, 1
      %p342 = scmp.ne.s32.totalorder %s337, %s339
      %p343 = scmp.eq.s32.totalorder %s32, 0
      %p344 = por %p342, %p343
      %p345 = scmp.ne.s32.totalorder %s337, %s339
      %p346 = scmp.eq.s32.totalorder %s37, 1
      %p347 = por %p345, %p346
      %p348 = scmp.ne.s32.totalorder %s339, %s340
      %p349 = scmp.eq.s32.totalorder %s37, 0
      %p350 = por %p348, %p349
      %p351 = scmp.ne.s32.totalorder %s339, %s340
      %p352 = scmp.eq.s32.totalorder %s38, 1
      %p353 = por %p351, %p352
      %p355 = scmp.ne.s32.totalorder %s340, %s354
      %p356 = scmp.eq.s32.totalorder %s38, 0
      %p357 = por %p355, %p356
      %s359 = sadd.s32 %s358, 1
      %p362 = scmp.eq.s32.totalorder %s32, 1
      %p363 = scmp.ne.s32.totalorder %s358, %s360
      %p364 = scmp.eq.s32.totalorder %s32, 0
      %p365 = por %p363, %p364
      %p366 = scmp.ne.s32.totalorder %s358, %s360
      %p367 = scmp.eq.s32.totalorder %s37, 1
      %p368 = por %p366, %p367
      %p369 = scmp.ne.s32.totalorder %s360, %s361
      %p370 = scmp.eq.s32.totalorder %s37, 0
      %p371 = por %p369, %p370
      %p372 = scmp.ne.s32.totalorder %s360, %s361
      %p373 = scmp.eq.s32.totalorder %s38, 1
      %p374 = por %p372, %p373
      %p376 = scmp.ne.s32.totalorder %s361, %s375
      %p377 = scmp.eq.s32.totalorder %s38, 0
      %p378 = por %p376, %p377
      %s380 = sadd.s32 %s379, 1
      %p383 = scmp.eq.s32.totalorder %s32, 1
      %p384 = scmp.ne.s32.totalorder %s379, %s381
      %p385 = scmp.eq.s32.totalorder %s32, 0
      %p386 = por %p384, %p385
      %p387 = scmp.ne.s32.totalorder %s379, %s381
      %p388 = scmp.eq.s32.totalorder %s37, 1
      %p389 = por %p387, %p388
      %p390 = scmp.ne.s32.totalorder %s381, %s382
      %p391 = scmp.eq.s32.totalorder %s37, 0
      %p392 = por %p390, %p391
      %p393 = scmp.ne.s32.totalorder %s381, %s382
      %p394 = scmp.eq.s32.totalorder %s38, 1
      %p395 = por %p393, %p394
      %p397 = scmp.ne.s32.totalorder %s382, %s396
      %p398 = scmp.eq.s32.totalorder %s38, 0
      %p399 = por %p397, %p398
      %s401 = sadd.s32 %s400, 1
      %p404 = scmp.eq.s32.totalorder %s32, 1
      %p405 = scmp.ne.s32.totalorder %s400, %s402
      %p406 = scmp.eq.s32.totalorder %s32, 0
      %p407 = por %p405, %p406
      %p408 = scmp.ne.s32.totalorder %s400, %s402
      %p409 = scmp.eq.s32.totalorder %s37, 1
      %p410 = por %p408, %p409
      %p411 = scmp.ne.s32.totalorder %s402, %s403
      %p412 = scmp.eq.s32.totalorder %s37, 0
      %p413 = por %p411, %p412
      %p414 = scmp.ne.s32.totalorder %s402, %s403
      %p415 = scmp.eq.s32.totalorder %s38, 1
      %p416 = por %p414, %p415
      %p418 = scmp.ne.s32.totalorder %s403, %s417
      %p419 = scmp.eq.s32.totalorder %s38, 0
      %p420 = por %p418, %p419
      %s422 = sadd.s32 %s421, 1
      %p425 = scmp.eq.s32.totalorder %s32, 1
      %p426 = scmp.ne.s32.totalorder %s421, %s423
      %p427 = scmp.eq.s32.totalorder %s32, 0
      %p428 = por %p426, %p427
      %p429 = scmp.ne.s32.totalorder %s421, %s423
      %p430 = scmp.eq.s32.totalorder %s37, 1
      %p431 = por %p429, %p430
      %p432 = scmp.ne.s32.totalorder %s423, %s424
      %p433 = scmp.eq.s32.totalorder %s37, 0
      %p434 = por %p432, %p433
      %p435 = scmp.ne.s32.totalorder %s423, %s424
      %p436 = scmp.eq.s32.totalorder %s38, 1
      %p437 = por %p435, %p436
      %p439 = scmp.ne.s32.totalorder %s424, %s438
      %p440 = scmp.eq.s32.totalorder %s38, 0
      %p441 = por %p439, %p440
      %s442 = ssub.s32 %s39, %s51
      %s443 = ssub.s32 %s40, %s47
      %s444 = sor.u32 %s442, %s443
      %p445 = scmp.eq.s32.totalorder %s444, 0
      %s447 = sadd.s32 %s446, 1
      %s448 = scalar_select %p445, %s446, %s447
      %p451 = pneg %p445
      %p452 = scmp.eq.s32.totalorder %s32, 1
      %p453 = por %p451, %p452
      %p454 = scmp.ne.s32.totalorder %s446, %s449
      %p455 = scmp.eq.s32.totalorder %s32, 0
      %p456 = por %p454, %p455
      %p457 = scmp.ne.s32.totalorder %s446, %s449
      %p458 = scmp.eq.s32.totalorder %s37, 1
      %p459 = por %p457, %p458
      %p460 = scmp.ne.s32.totalorder %s449, %s450
      %p461 = scmp.eq.s32.totalorder %s37, 0
      %p462 = por %p460, %p461
      %p463 = scmp.ne.s32.totalorder %s449, %s450
      %p464 = scmp.eq.s32.totalorder %s38, 1
      %p465 = por %p463, %p464
      %p467 = scmp.ne.s32.totalorder %s450, %s466
      %p468 = scmp.eq.s32.totalorder %s38, 0
      %p469 = por %p467, %p468
      %p470 = scmp.le.s32.totalorder 1, %s32
      %p471 = scmp.lt.s32.totalorder %s32, 3
      %p472 = pnand %p470, %p471
      %p473 = pneg %p472
      // Predicated region
      $region9: #{tpu_custom_call.1} parent=5 // pred_check
        _
      $region10: #{tpu_custom_call.1} parent=5 // pred_check_branch
        %475 = sbr.rel (%p472) target = $region12
      $region11: #{tpu_custom_call.1} parent=5 // pred_region
        %s476 = ssub.s32 %s32, 1
        // Predicated region
        $region13: #{tpu_custom_call.1} parent=11 // pred_check
          %p477 = pneg %p119
        $region14: #{tpu_custom_call.1} parent=11 // pred_check_branch
          %479 = sbr.rel (%p477) target = $region16
        $region15: #{tpu_custom_call.1} parent=11 // pred_region
          _
        $region16: #{tpu_custom_call.1} parent=11 // pred_fallthru
          _
        // Predicated region
        $region17: #{tpu_custom_call.1} parent=11 // pred_check
          %p480 = pneg %p140
        $region18: #{tpu_custom_call.1} parent=11 // pred_check_branch
          %482 = sbr.rel (%p480) target = $region20
        $region19: #{tpu_custom_call.1} parent=11 // pred_region
          _
        $region20: #{tpu_custom_call.1} parent=11 // pred_fallthru
          _
        // Predicated region
        $region21: #{tpu_custom_call.1} parent=11 // pred_check
          %p483 = pneg %p161
        $region22: #{tpu_custom_call.1} parent=11 // pred_check_branch
          %485 = sbr.rel (%p483) target = $region24
        $region23: #{tpu_custom_call.1} parent=11 // pred_region
          _
        $region24: #{tpu_custom_call.1} parent=11 // pred_fallthru
          _
        // Predicated region
        $region25: #{tpu_custom_call.1} parent=11 // pred_check
          %p486 = pneg %p182
        $region26: #{tpu_custom_call.1} parent=11 // pred_check_branch
          %488 = sbr.rel (%p486) target = $region28
        $region27: #{tpu_custom_call.1} parent=11 // pred_region
          %s490 = ssub.s32 16, 16
          %491 = vsyncadd [#allocation10], %s490
          %s493 = sshll.u32 [#allocation9], 4
          %s494 = int_to_ptr.vmem [resolvable:$true] %s493
          %496 = dma.hbm_to_vmem [thread:$0]  %s5, 16, %s494, [#allocation10]
        $region28: #{tpu_custom_call.1} parent=11 // pred_fallthru
          _
        // Predicated region
        $region29: #{tpu_custom_call.1} parent=11 // pred_check
          %p497 = pneg %p203
        $region30: #{tpu_custom_call.1} parent=11 // pred_check_branch
          %499 = sbr.rel (%p497) target = $region32
        $region31: #{tpu_custom_call.1} parent=11 // pred_region
          _
        $region32: #{tpu_custom_call.1} parent=11 // pred_fallthru
          _
        // Predicated region
        $region33: #{tpu_custom_call.1} parent=11 // pred_check
          %p500 = pneg %p224
        $region34: #{tpu_custom_call.1} parent=11 // pred_check_branch
          %502 = sbr.rel (%p500) target = $region36
        $region35: #{tpu_custom_call.1} parent=11 // pred_region
          %s504 = ssub.s32 16, 16
          %505 = vsyncadd [#allocation10], %s504
          %s507 = sshll.u32 [#allocation11], 4
          %s508 = int_to_ptr.vmem [resolvable:$true] %s507
          %510 = dma.hbm_to_vmem [thread:$0]  %s7, 16, %s508, [#allocation10]
        $region36: #{tpu_custom_call.1} parent=11 // pred_fallthru
          _
        // Predicated region
        $region37: #{tpu_custom_call.1} parent=11 // pred_check
          %p511 = pneg %p245
        $region38: #{tpu_custom_call.1} parent=11 // pred_check_branch
          %513 = sbr.rel (%p511) target = $region40
        $region39: #{tpu_custom_call.1} parent=11 // pred_region
          _
        $region40: #{tpu_custom_call.1} parent=11 // pred_fallthru
          _
        // Predicated region
        $region41: #{tpu_custom_call.1} parent=11 // pred_check
          %p514 = pneg %p266
        $region42: #{tpu_custom_call.1} parent=11 // pred_check_branch
          %516 = sbr.rel (%p514) target = $region44
        $region43: #{tpu_custom_call.1} parent=11 // pred_region
          %s518 = ssub.s32 16, 16
          %519 = vsyncadd [#allocation13], %s518
          %s521 = sshll.u32 [#allocation12], 4
          %s522 = int_to_ptr.vmem [resolvable:$true] %s521
          %524 = dma.hbm_to_vmem [thread:$0]  %s9, 16, %s522, [#allocation13]
        $region44: #{tpu_custom_call.1} parent=11 // pred_fallthru
          _
        // Predicated region
        $region45: #{tpu_custom_call.1} parent=11 // pred_check
          %p525 = pneg %p287
        $region46: #{tpu_custom_call.1} parent=11 // pred_check_branch
          %527 = sbr.rel (%p525) target = $region48
        $region47: #{tpu_custom_call.1} parent=11 // pred_region
          _
        $region48: #{tpu_custom_call.1} parent=11 // pred_fallthru
          _
        // Predicated region
        $region49: #{tpu_custom_call.1} parent=11 // pred_check
          %p528 = pneg %p308
        $region50: #{tpu_custom_call.1} parent=11 // pred_check_branch
          %530 = sbr.rel (%p528) target = $region52
        $region51: #{tpu_custom_call.1} parent=11 // pred_region
          _
        $region52: #{tpu_custom_call.1} parent=11 // pred_fallthru
          _
        // Predicated region
        $region53: #{tpu_custom_call.1} parent=11 // pred_check
          %p531 = pneg %p329
        $region54: #{tpu_custom_call.1} parent=11 // pred_check_branch
          %533 = sbr.rel (%p531) target = $region56
        $region55: #{tpu_custom_call.1} parent=11 // pred_region
          _
        $region56: #{tpu_custom_call.1} parent=11 // pred_fallthru
          _
        // Predicated region
        $region57: #{tpu_custom_call.1} parent=11 // pred_check
          %p534 = pneg %p350
        $region58: #{tpu_custom_call.1} parent=11 // pred_check_branch
          %536 = sbr.rel (%p534) target = $region60
        $region59: #{tpu_custom_call.1} parent=11 // pred_region
          _
        $region60: #{tpu_custom_call.1} parent=11 // pred_fallthru
          _
        // Predicated region
        $region61: #{tpu_custom_call.1} parent=11 // pred_check
          %p537 = pneg %p371
        $region62: #{tpu_custom_call.1} parent=11 // pred_check_branch
          %539 = sbr.rel (%p537) target = $region64
        $region63: #{tpu_custom_call.1} parent=11 // pred_region
          _
        $region64: #{tpu_custom_call.1} parent=11 // pred_fallthru
          _
        // Predicated region
        $region65: #{tpu_custom_call.1} parent=11 // pred_check
          %p540 = pneg %p392
        $region66: #{tpu_custom_call.1} parent=11 // pred_check_branch
          %542 = sbr.rel (%p540) target = $region68
        $region67: #{tpu_custom_call.1} parent=11 // pred_region
          _
        $region68: #{tpu_custom_call.1} parent=11 // pred_fallthru
          _
        // Predicated region
        $region69: #{tpu_custom_call.1} parent=11 // pred_check
          %p543 = pneg %p413
        $region70: #{tpu_custom_call.1} parent=11 // pred_check_branch
          %545 = sbr.rel (%p543) target = $region72
        $region71: #{tpu_custom_call.1} parent=11 // pred_region
          _
        $region72: #{tpu_custom_call.1} parent=11 // pred_fallthru
          _
        // Predicated region
        $region73: #{tpu_custom_call.1} parent=11 // pred_check
          %p546 = pneg %p434
        $region74: #{tpu_custom_call.1} parent=11 // pred_check_branch
          %548 = sbr.rel (%p546) target = $region76
        $region75: #{tpu_custom_call.1} parent=11 // pred_region
          _
        $region76: #{tpu_custom_call.1} parent=11 // pred_fallthru
          _
      $region12: #{tpu_custom_call.1} parent=5 // pred_fallthru
        _
      %p549 = scmp.lt.s32.totalorder %s32, 2
      // Predicated region
      $region77: #{tpu_custom_call.1} parent=5 // pred_check
        %p550 = pneg %p549
      $region78: #{tpu_custom_call.1} parent=5 // pred_check_branch
        %552 = sbr.rel (%p550) target = $region80
      $region79: #{tpu_custom_call.1} parent=5 // pred_region
        // Predicated region
        $region81: #{tpu_custom_call.1} parent=79 // pred_check
          %p553 = pneg %p64
        $region82: #{tpu_custom_call.1} parent=79 // pred_check_branch
          %555 = sbr.rel (%p553) target = $region84
        $region83: #{tpu_custom_call.1} parent=79 // pred_region
          %s556 = sand.u32 %s54, 1
          %s557 = scalar_lea.sflag [#allocation7], %s556
          %s558 = sand.u32 %s54, 1
          %s559 = smul.addr %s558, 4
          %s560 = scalar_lea.vmem [#allocation6], %s559
          %s562 = ssub.s32 64, 64
          %563 = vsyncadd %s557, %s562
          %s564 = smul.addr %s39, 64
          %s565 = scalar_lea.hbm %s0, %s564
          %s567 = sshll.u32 %s560, 4
          %s568 = int_to_ptr.vmem [resolvable:$true] %s567
          %570 = dma.hbm_to_vmem [thread:$0]  %s565, 64, %s568, %s557
        $region84: #{tpu_custom_call.1} parent=79 // pred_fallthru
          _
        // Predicated region
        $region85: #{tpu_custom_call.1} parent=79 // pred_check
          %p571 = pneg %p92
        $region86: #{tpu_custom_call.1} parent=79 // pred_check_branch
          %573 = sbr.rel (%p571) target = $region88
        $region87: #{tpu_custom_call.1} parent=79 // pred_region
          %p574 = scmp.lt.s32.totalorder %s39, 1
          %s575 = scalar_select %p574, %s39, 1
          %p576 = scmp.lt.s32.totalorder %s40, 0
          %s577 = scalar_select %p576, %s40, 0
          %s578 = sadd.s32 %s577, %s575
          %s579 = smul.addr %s578, 8
          %s580 = scalar_lea.vmem %s1, %s579
        $region88: #{tpu_custom_call.1} parent=79 // pred_fallthru
          _
      $region80: #{tpu_custom_call.1} parent=5 // pred_fallthru
        _
      %p581 = scmp.le.s32.totalorder 1, %s32
      %p582 = scmp.lt.s32.totalorder %s32, 3
      %p583 = pnand %p581, %p582
      %p584 = pneg %p583
      // Predicated region
      $region89: #{tpu_custom_call.1} parent=5 // pred_check
        _
      $region90: #{tpu_custom_call.1} parent=5 // pred_check_branch
        %586 = sbr.rel (%p583) target = $region92
      $region91: #{tpu_custom_call.1} parent=5 // pred_region
        %s587 = ssub.s32 %s32, 1
        %s588 = sand.u32 %s57, 1
        %s589 = scalar_lea.sflag [#allocation7], %s588
        %s590 = sand.u32 %s57, 1
        %s591 = smul.addr %s590, 4
        %s592 = scalar_lea.vmem [#allocation6], %s591
        // Predicated region
        $region93: #{tpu_custom_call.1} parent=91 // pred_check
          %p593 = pneg %p70
        $region94: #{tpu_custom_call.1} parent=91 // pred_check_branch
          %595 = sbr.rel (%p593) target = $region96
        $region95: #{tpu_custom_call.1} parent=91 // pred_region
          %596 = dma.done %s589, 64
        $region96: #{tpu_custom_call.1} parent=91 // pred_fallthru
          _
        // Predicated region
        $region97: #{tpu_custom_call.1} parent=91 // pred_check
          %p597 = pneg %p182
        $region98: #{tpu_custom_call.1} parent=91 // pred_check_branch
          %599 = sbr.rel (%p597) target = $region100
        $region99: #{tpu_custom_call.1} parent=91 // pred_region
          %600 = dma.done [#allocation10], 16
        $region100: #{tpu_custom_call.1} parent=91 // pred_fallthru
          _
        // Predicated region
        $region101: #{tpu_custom_call.1} parent=91 // pred_check
          %p601 = pneg %p224
        $region102: #{tpu_custom_call.1} parent=91 // pred_check_branch
          %603 = sbr.rel (%p601) target = $region104
        $region103: #{tpu_custom_call.1} parent=91 // pred_region
          %604 = dma.done [#allocation10], 16
        $region104: #{tpu_custom_call.1} parent=91 // pred_fallthru
          _
        // Predicated region
        $region105: #{tpu_custom_call.1} parent=91 // pred_check
          %p605 = pneg %p266
        $region106: #{tpu_custom_call.1} parent=91 // pred_check_branch
          %607 = sbr.rel (%p605) target = $region108
        $region107: #{tpu_custom_call.1} parent=91 // pred_region
          %608 = dma.done [#allocation13], 16
        $region108: #{tpu_custom_call.1} parent=91 // pred_fallthru
          _
        %s609 = sand.u32 %s57, 1
        %s610 = scalar_lea.sflag [#allocation7], %s609
        %s611 = sand.u32 %s57, 1
        %s612 = smul.addr %s611, 4
        %s613 = scalar_lea.vmem [#allocation6], %s612
        %p614 = pneg %p70
        %p615 = pneg %p67
        %p616 = scmp.lt.s32.totalorder %s41, 1
        %s617 = scalar_select %p616, %s41, 1
        %p618 = scmp.lt.s32.totalorder %s42, 0
        %s619 = scalar_select %p618, %s42, 0
        %s620 = sadd.s32 %s619, %s617
        %s621 = smul.addr %s620, 8
        %s622 = scalar_lea.vmem %s1, %s621
        %p623 = pneg %p98
        %p624 = pneg %p95
        %p625 = pneg %p119
        %p626 = pneg %p116
        %p627 = pneg %p140
        %p628 = pneg %p137
        %p629 = pneg %p161
        %p630 = pneg %p158
        %p631 = pneg %p182
        %p632 = pneg %p179
        %p633 = pneg %p203
        %p634 = pneg %p200
        %p635 = pneg %p224
        %p636 = pneg %p221
        %p637 = pneg %p245
        %p638 = pneg %p242
        %p639 = pneg %p266
        %p640 = pneg %p263
        %p641 = pneg %p287
        %p642 = pneg %p284
        %p643 = pneg %p308
        %p644 = pneg %p305
        %p645 = pneg %p329
        %p646 = pneg %p326
        %p647 = pneg %p350
        %p648 = pneg %p347
        %p649 = pneg %p371
        %p650 = pneg %p368
        %p651 = pneg %p392
        %p652 = pneg %p389
        %p653 = pneg %p413
        %p654 = pneg %p410
        %p655 = pneg %p434
        %p656 = pneg %p431
        %p657 = pneg %p462
        %p658 = pneg %p459
        %s659 = sand.u32 %s449, 1
        %s660 = scalar_lea.sflag [#allocation8], %s659
        %s661 = sand.u32 %s449, 1
        %s662 = smul.addr %s661, 8
        %s663 = scalar_lea.vmem [#allocation14], %s662
        %p664 = scmp.lt.s32.totalorder %s41, 1
        %s665 = scalar_select %p664, %s41, 1
        %p666 = scmp.lt.s32.totalorder %s42, 0
        %s667 = scalar_select %p666, %s42, 0
        %s668 = sadd.s32 %s667, %s665
        %s669 = smul.addr %s668, 8
        %s670 = scalar_lea.vmem %s1, %s669
        %p672 = scmp.eq.s32.totalorder %s42, 0
        // Predicated region
        $region109: #{tpu_custom_call.1} parent=91 // pred_check
          %p673 = pneg %p672
        $region110: #{tpu_custom_call.1} parent=91 // pred_check_branch
          %675 = sbr.rel (%p673) target = $region112
        $region111: #{tpu_custom_call.1} parent=91 // pred_region
          %v676 = vld [vmem:[%s592] sm:$0xf]
          %v677 = vunpack.c.l.bf16 %v676
          %v678 = vld [vmem:[%s2] sm:$0x1]
          %v679 = vld [vmem:[%s3] sm:$0x1]
          %vm680 = vcmask 261120
          %v681 = vsel %vm680, %v677, 0.0
          %682 = vadd.xlane.f32.xlu0 %v681
          %v683 = vpop.xlane.xlu0 %682
          %v684 = vrcp.pop 32.0
          %v685 = vmul.f32 %v683, %v684
          %v686 = vsub.f32 %v677, %v685
          %v687 = vmul.f32 %v686, %v686
          %v688 = vsel %vm680, %v687, 0.0
          %689 = vadd.xlane.f32.xlu0 %v688
          %v690 = vpop.xlane.xlu0 %689
          %v691 = vmul.f32 %v690, %v684
          %v692 = vadd.f32 %v691, 1e-05
          %v693 = vrsqrt.pop %v692
          %v694 = vmul.f32 %v686, %v693
          %v696 = vlaneseq
          %v697 = vshrl.u32 %v696, 7
          %v698 = vsub.s32 0, %v697
          %v699 = vrot.slane %v678, %v698
          %v701 = vmul.f32 %v694, %v699
          %v703 = vlaneseq
          %v704 = vshrl.u32 %v703, 7
          %v705 = vsub.s32 0, %v704
          %v706 = vrot.slane %v679, %v705
          %v708 = vadd.f32 %v701, %v706
          %v709 = vpack.c.bf16 %v708, %v708
          %vm710 = vcmask 257024
          %711 = vst.msk [vmem:[#allocation2] sm:$0xf] %vm710, %v709
          %v712 = vld [vmem:[%s6] sm:$0xf]
          %v713 = vld [vmem:[%s6 + $0x4] sm:$0xf]
          %v714 = vld [vmem:[%s6 + $0x8] sm:$0xf]
          %v715 = vld [vmem:[%s6 + $0xc] sm:$0xf]
          %v716 = vld [vmem:[#allocation11] sm:$0x1]
          %v718 = vlaneseq
          %v719 = vshrl.u32 %v718, 7
          %v720 = vsub.s32 0, %v719
          %v721 = vrot.slane %v716, %v720
          %v727 = vunpack.c.l.b16 %v712
          %v728 = vunpack.c.l.b16 %v713
          %v729 = vunpack.c.l.b16 %v714
          %v730 = vunpack.c.l.b16 %v715
          %v731 = vpack.c.b16 %v728, %v727
          %v732 = vpack.c.b16 %v730, %v729
          %v736 = vsel %vm680, %v709, 0
          %738 = vmatprep.subr.bf16.mxu0 0
          %739 = vmatpush1.bf16.msra.mxu0 %v731
          %740 = vmatprep.subr.bf16.mxu0 0
          %741 = vmatpush1.bf16.msra.mxu0 %v732
          %742 = vmatprep.subr.bf16.mxu0 0
          %743 = vmatpush1.bf16.msra.mxu0 0
          %744 = vmatprep.subr.bf16.mxu0 0
          %745 = vmatpush1.bf16.msra.mxu0 0
          %746 = vmatprep.subr.bf16.mxu0 0
          %747 = vmatpush1.bf16.msra.mxu0 0
          %748 = vmatprep.subr.bf16.mxu0 0
          %749 = vmatpush1.bf16.msra.mxu0 0
          %750 = vmatprep.subr.bf16.mxu0 0
          %751 = vmatpush1.bf16.msra.mxu0 0
          %752 = vmatprep.subr.bf16.mxu0 0
          %753 = vmatpush1.bf16.msra.mxu0 0
          %754 = vmatprep.subr.bf16.mxu0 0
          %755 = vmatpush1.bf16.msra.mxu0 0
          %756 = vmatprep.subr.bf16.mxu0 0
          %757 = vmatpush1.bf16.msra.mxu0 0
          %758 = vmatprep.subr.bf16.mxu0 0
          %759 = vmatpush1.bf16.msra.mxu0 0
          %760 = vmatprep.subr.bf16.mxu0 0
          %761 = vmatpush1.bf16.msra.mxu0 0
          %762 = vmatprep.subr.bf16.mxu0 0
          %763 = vmatpush1.bf16.msra.mxu0 0
          %764 = vmatprep.subr.bf16.mxu0 0
          %765 = vmatpush1.bf16.msra.mxu0 0
          %766 = vmatprep.subr.bf16.mxu0 0
          %767 = vmatpush1.bf16.msra.mxu0 0
          %768 = vmatprep.subr.bf16.mxu0 0
          %769 = vmatpush1.bf16.msra.mxu0 0
          %770 = vmatprep.mubr.bf16.mxu0 0
          %771 = vmatmul.mubr.bf16.gmra.mrb[0].mxu0 %v736
          %v772 = vpop.f32.mrb[0].mxu0
          %v773 = vadd.f32 %v721, %v772
          %v774 = vpop.f32.mrb[0].mxu0
          %v775 = vpop.f32.mrb[0].mxu0
          %v776 = vpop.f32.mrb[0].mxu0
          %777 = vdwg.mxu0
          %v778 = vld [vmem:[%s8] sm:$0xf]
          %v779 = vld [vmem:[%s8 + $0x4] sm:$0xf]
          %v780 = vld [vmem:[%s8 + $0x8] sm:$0xf]
          %v781 = vld [vmem:[%s8 + $0xc] sm:$0xf]
          %v782 = vld [vmem:[#allocation12] sm:$0x1]
          %v784 = vlaneseq
          %v785 = vshrl.u32 %v784, 7
          %v786 = vsub.s32 0, %v785
          %v787 = vrot.slane %v782, %v786
          %v793 = vunpack.c.l.b16 %v778
          %v794 = vunpack.c.l.b16 %v779
          %v795 = vunpack.c.l.b16 %v780
          %v796 = vunpack.c.l.b16 %v781
          %v797 = vpack.c.b16 %v794, %v793
          %v798 = vpack.c.b16 %v796, %v795
          %801 = vmatprep.subr.bf16.mxu0 0
          %802 = vmatpush1.bf16.msra.mxu0 %v797
          %803 = vmatprep.subr.bf16.mxu0 0
          %804 = vmatpush1.bf16.msra.mxu0 %v798
          %805 = vmatprep.subr.bf16.mxu0 0
          %806 = vmatpush1.bf16.msra.mxu0 0
          %807 = vmatprep.subr.bf16.mxu0 0
          %808 = vmatpush1.bf16.msra.mxu0 0
          %809 = vmatprep.subr.bf16.mxu0 0
          %810 = vmatpush1.bf16.msra.mxu0 0
          %811 = vmatprep.subr.bf16.mxu0 0
          %812 = vmatpush1.bf16.msra.mxu0 0
          %813 = vmatprep.subr.bf16.mxu0 0
          %814 = vmatpush1.bf16.msra.mxu0 0
          %815 = vmatprep.subr.bf16.mxu0 0
          %816 = vmatpush1.bf16.msra.mxu0 0
          %817 = vmatprep.subr.bf16.mxu0 0
          %818 = vmatpush1.bf16.msra.mxu0 0
          %819 = vmatprep.subr.bf16.mxu0 0
          %820 = vmatpush1.bf16.msra.mxu0 0
          %821 = vmatprep.subr.bf16.mxu0 0
          %822 = vmatpush1.bf16.msra.mxu0 0
          %823 = vmatprep.subr.bf16.mxu0 0
          %824 = vmatpush1.bf16.msra.mxu0 0
          %825 = vmatprep.subr.bf16.mxu0 0
          %826 = vmatpush1.bf16.msra.mxu0 0
          %827 = vmatprep.subr.bf16.mxu0 0
          %828 = vmatpush1.bf16.msra.mxu0 0
          %829 = vmatprep.subr.bf16.mxu0 0
          %830 = vmatpush1.bf16.msra.mxu0 0
          %831 = vmatprep.subr.bf16.mxu0 0
          %832 = vmatpush1.bf16.msra.mxu0 0
          %833 = vmatprep.mubr.bf16.mxu0 0
          %834 = vmatmul.mubr.bf16.gmra.mrb[0].mxu0 %v736
          %v835 = vpop.f32.mrb[0].mxu0
          %v836 = vadd.f32 %v787, %v835
          %v837 = vpop.f32.mrb[0].mxu0
          %v838 = vpop.f32.mrb[0].mxu0
          %v839 = vpop.f32.mrb[0].mxu0
          %840 = vdwg.mxu0
          %v841 = vpack.c.bf16 %v773, %v773
          %842 = vst.msk [vmem:[#allocation3] sm:$0xf] %vm710, %v841
          %v843 = vpack.c.bf16 %v836, %v836
          %844 = vst.msk [vmem:[#allocation4] sm:$0xf] %vm710, %v843
        $region112: #{tpu_custom_call.1} parent=91 // pred_fallthru
          _
        %v845 = vld [vmem:[%s670] sm:$0xff]
        %s846 = smul.u32 %s42, 8
        %s847 = sshra.s32 %s846, 3
        %s848 = sand.u32 %s846, 7
        %s849 = smul.addr %s847, 4
        %s850 = scalar_lea.vmem [#allocation2], %s849
        %v851 = vld [vmem:[%s850] sm:$0xf]
        %v852 = vld [vmem:[%s4] sm:$0xf]
        %v853 = vld [vmem:[%s4 + $0x4] sm:$0xf]
        %v854 = vld [vmem:[%s4 + $0x8] sm:$0xf]
        %v855 = vld [vmem:[%s4 + $0xc] sm:$0xf]
        %v856 = vld [vmem:[#allocation9] sm:$0x1]
        %v858 = vlaneseq
        %v859 = vshrl.u32 %v858, 7
        %v860 = vsub.s32 0, %v859
        %v861 = vrot.slane %v856, %v860
        %v867 = vunpack.c.l.b16 %v852
        %v868 = vunpack.c.l.b16 %v853
        %v869 = vunpack.c.l.b16 %v854
        %v870 = vunpack.c.l.b16 %v855
        %v871 = vpack.c.b16 %v868, %v867
        %v872 = vpack.c.b16 %v870, %v869
        %vm875 = vcmask 261120
        %v877 = vsel %vm875, %v851, 0
        %879 = vmatprep.subr.bf16.mxu0 0
        %880 = vmatpush1.bf16.msra.mxu0 %v871
        %881 = vmatprep.subr.bf16.mxu0 0
        %882 = vmatpush1.bf16.msra.mxu0 %v872
        %883 = vmatprep.subr.bf16.mxu0 0
        %884 = vmatpush1.bf16.msra.mxu0 0
        %885 = vmatprep.subr.bf16.mxu0 0
        %886 = vmatpush1.bf16.msra.mxu0 0
        %887 = vmatprep.subr.bf16.mxu0 0
        %888 = vmatpush1.bf16.msra.mxu0 0
        %889 = vmatprep.subr.bf16.mxu0 0
        %890 = vmatpush1.bf16.msra.mxu0 0
        %891 = vmatprep.subr.bf16.mxu0 0
        %892 = vmatpush1.bf16.msra.mxu0 0
        %893 = vmatprep.subr.bf16.mxu0 0
        %894 = vmatpush1.bf16.msra.mxu0 0
        %895 = vmatprep.subr.bf16.mxu0 0
        %896 = vmatpush1.bf16.msra.mxu0 0
        %897 = vmatprep.subr.bf16.mxu0 0
        %898 = vmatpush1.bf16.msra.mxu0 0
        %899 = vmatprep.subr.bf16.mxu0 0
        %900 = vmatpush1.bf16.msra.mxu0 0
        %901 = vmatprep.subr.bf16.mxu0 0
        %902 = vmatpush1.bf16.msra.mxu0 0
        %903 = vmatprep.subr.bf16.mxu0 0
        %904 = vmatpush1.bf16.msra.mxu0 0
        %905 = vmatprep.subr.bf16.mxu0 0
        %906 = vmatpush1.bf16.msra.mxu0 0
        %907 = vmatprep.subr.bf16.mxu0 0
        %908 = vmatpush1.bf16.msra.mxu0 0
        %909 = vmatprep.subr.bf16.mxu0 0
        %910 = vmatpush1.bf16.msra.mxu0 0
        %911 = vmatprep.mubr.bf16.mxu0 0
        %912 = vmatmul.mubr.bf16.gmra.mrb[0].mxu0 %v877
        %v913 = vpop.f32.mrb[0].mxu0
        %v914 = vadd.f32 %v861, %v913
        %v915 = vpop.f32.mrb[0].mxu0
        %v916 = vpop.f32.mrb[0].mxu0
        %v917 = vpop.f32.mrb[0].mxu0
        %918 = vdwg.mxu0
        %v919 = vpack.c.bf16 %v914, %v914
        %v920 = vld [vmem:[#allocation3] sm:$0xf]
        %v921 = vld [vmem:[#allocation4] sm:$0xf]
        %vm922 = vcmask 64512
        %v924 = vsel %vm922, %v919, 0
        %v927 = vsel %vm922, %v920, 0
        %929 = vmatprep.subr.bf16.mxu0 0
        %930 = vmatpush1.bf16.xpose.msra.mxu0 %v927
        %931 = vmatprep.subr.bf16.mxu0 0
        %932 = vmatpush1.bf16.xpose.msra.mxu0 0
        %933 = vmatprep.subr.bf16.mxu0 0
        %934 = vmatpush1.bf16.xpose.msra.mxu0 0
        %935 = vmatprep.subr.bf16.mxu0 0
        %936 = vmatpush1.bf16.xpose.msra.mxu0 0
        %937 = vmatprep.subr.bf16.mxu0 0
        %938 = vmatpush1.bf16.xpose.msra.mxu0 0
        %939 = vmatprep.subr.bf16.mxu0 0
        %940 = vmatpush1.bf16.xpose.msra.mxu0 0
        %941 = vmatprep.subr.bf16.mxu0 0
        %942 = vmatpush1.bf16.xpose.msra.mxu0 0
        %943 = vmatprep.subr.bf16.mxu0 0
        %944 = vmatpush1.bf16.xpose.msra.mxu0 0
        %945 = vmatprep.subr.bf16.mxu0 0
        %946 = vmatpush1.bf16.xpose.msra.mxu0 0
        %947 = vmatprep.subr.bf16.mxu0 0
        %948 = vmatpush1.bf16.xpose.msra.mxu0 0
        %949 = vmatprep.subr.bf16.mxu0 0
        %950 = vmatpush1.bf16.xpose.msra.mxu0 0
        %951 = vmatprep.subr.bf16.mxu0 0
        %952 = vmatpush1.bf16.xpose.msra.mxu0 0
        %953 = vmatprep.subr.bf16.mxu0 0
        %954 = vmatpush1.bf16.xpose.msra.mxu0 0
        %955 = vmatprep.subr.bf16.mxu0 0
        %956 = vmatpush1.bf16.xpose.msra.mxu0 0
        %957 = vmatprep.subr.bf16.mxu0 0
        %958 = vmatpush1.bf16.xpose.msra.mxu0 0
        %959 = vmatprep.subr.bf16.mxu0 0
        %960 = vmatpush1.bf16.xpose.msra.mxu0 0
        %961 = vmatprep.mubr.bf16.mxu0 0
        %962 = vmatmul.mubr.bf16.gmra.mrb[0].mxu0 %v924
        %v963 = vpop.f32.mrb[0].mxu0
        %v964 = vadd.f32 0.0, %v963
        %v965 = vpop.f32.mrb[0].mxu0
        %v966 = vpop.f32.mrb[0].mxu0
        %v967 = vpop.f32.mrb[0].mxu0
        %968 = vdwg.mxu0
        %v969 = vsel %vm922, %v964, -inf
        %970 = vmax.xlane.f32.xlu0 %v969
        %v971 = vpop.xlane.xlu0 %970
        %v972 = vsub.f32 %v964, %v971
        %v973 = vmul.f32 %v972, 1.442695
        %v974 = vpow.pop %v973
        %v975 = vsel %vm922, %v974, 0.0
        %976 = vadd.xlane.f32.xlu0 %v975
        %v977 = vpop.xlane.xlu0 %976
        %v978 = vrcp.pop %v977
        %v979 = vmul.f32 %v974, %v978
        %v980 = vpack.c.bf16 %v979, %v979
        %v982 = vsel %vm922, %v980, 0
        %vm984 = vcmask 1043456
        %v986 = vsel %vm984, %v921, 0
        %988 = vmatprep.subr.bf16.mxu0 0
        %989 = vmatpush1.bf16.msra.mxu0 %v986
        %990 = vmatprep.subr.bf16.mxu0 0
        %991 = vmatpush1.bf16.msra.mxu0 0
        %992 = vmatprep.subr.bf16.mxu0 0
        %993 = vmatpush1.bf16.msra.mxu0 0
        %994 = vmatprep.subr.bf16.mxu0 0
        %995 = vmatpush1.bf16.msra.mxu0 0
        %996 = vmatprep.subr.bf16.mxu0 0
        %997 = vmatpush1.bf16.msra.mxu0 0
        %998 = vmatprep.subr.bf16.mxu0 0
        %999 = vmatpush1.bf16.msra.mxu0 0
        %1000 = vmatprep.subr.bf16.mxu0 0
        %1001 = vmatpush1.bf16.msra.mxu0 0
        %1002 = vmatprep.subr.bf16.mxu0 0
        %1003 = vmatpush1.bf16.msra.mxu0 0
        %1004 = vmatprep.subr.bf16.mxu0 0
        %1005 = vmatpush1.bf16.msra.mxu0 0
        %1006 = vmatprep.subr.bf16.mxu0 0
        %1007 = vmatpush1.bf16.msra.mxu0 0
        %1008 = vmatprep.subr.bf16.mxu0 0
        %1009 = vmatpush1.bf16.msra.mxu0 0
        %1010 = vmatprep.subr.bf16.mxu0 0
        %1011 = vmatpush1.bf16.msra.mxu0 0
        %1012 = vmatprep.subr.bf16.mxu0 0
        %1013 = vmatpush1.bf16.msra.mxu0 0
        %1014 = vmatprep.subr.bf16.mxu0 0
        %1015 = vmatpush1.bf16.msra.mxu0 0
        %1016 = vmatprep.subr.bf16.mxu0 0
        %1017 = vmatpush1.bf16.msra.mxu0 0
        %1018 = vmatprep.subr.bf16.mxu0 0
        %1019 = vmatpush1.bf16.msra.mxu0 0
        %1020 = vmatprep.mubr.bf16.mxu0 0
        %1021 = vmatmul.mubr.bf16.gmra.mrb[0].mxu0 %v982
        %v1022 = vpop.f32.mrb[0].mxu0
        %v1023 = vadd.f32 0.0, %v1022
        %v1024 = vpop.f32.mrb[0].mxu0
        %v1025 = vpop.f32.mrb[0].mxu0
        %v1026 = vpop.f32.mrb[0].mxu0
        %1027 = vdwg.mxu0
        %v1028 = vpack.c.bf16 %v1023, %v1023
        %vm1029 = vcmask 60416
        %1030 = vst.msk [vmem:[#allocation5] sm:$0xf] %vm1029, %v1028
        %v1031 = vld [vmem:[#allocation3] sm:$0xf]
        %v1032 = vld [vmem:[#allocation4] sm:$0xf]
        %1034 = vrot.lane.b32.xlu0 %v919, 120
        %v1035 = vpop.permute.xlu0 %1034
        %v1037 = vunpack.c.l.b16 %v1031
        %v1038 = vpack.c.b16 %v1037, %v1037
        %1039 = vrot.lane.b32.xlu0 %v1038, 120
        %v1040 = vpop.permute.xlu0 %1039
        %v1042 = vsel %vm922, %v1035, 0
        %v1045 = vsel %vm922, %v1040, 0
        %1047 = vmatprep.subr.bf16.mxu0 0
        %1048 = vmatpush1.bf16.xpose.msra.mxu0 %v1045
        %1049 = vmatprep.subr.bf16.mxu0 0
        %1050 = vmatpush1.bf16.xpose.msra.mxu0 0
        %1051 = vmatprep.subr.bf16.mxu0 0
        %1052 = vmatpush1.bf16.xpose.msra.mxu0 0
        %1053 = vmatprep.subr.bf16.mxu0 0
        %1054 = vmatpush1.bf16.xpose.msra.mxu0 0
        %1055 = vmatprep.subr.bf16.mxu0 0
        %1056 = vmatpush1.bf16.xpose.msra.mxu0 0
        %1057 = vmatprep.subr.bf16.mxu0 0
        %1058 = vmatpush1.bf16.xpose.msra.mxu0 0
        %1059 = vmatprep.subr.bf16.mxu0 0
        %1060 = vmatpush1.bf16.xpose.msra.mxu0 0
        %1061 = vmatprep.subr.bf16.mxu0 0
        %1062 = vmatpush1.bf16.xpose.msra.mxu0 0
        %1063 = vmatprep.subr.bf16.mxu0 0
        %1064 = vmatpush1.bf16.xpose.msra.mxu0 0
        %1065 = vmatprep.subr.bf16.mxu0 0
        %1066 = vmatpush1.bf16.xpose.msra.mxu0 0
        %1067 = vmatprep.subr.bf16.mxu0 0
        %1068 = vmatpush1.bf16.xpose.msra.mxu0 0
        %1069 = vmatprep.subr.bf16.mxu0 0
        %1070 = vmatpush1.bf16.xpose.msra.mxu0 0
        %1071 = vmatprep.subr.bf16.mxu0 0
        %1072 = vmatpush1.bf16.xpose.msra.mxu0 0
        %1073 = vmatprep.subr.bf16.mxu0 0
        %1074 = vmatpush1.bf16.xpose.msra.mxu0 0
        %1075 = vmatprep.subr.bf16.mxu0 0
        %1076 = vmatpush1.bf16.xpose.msra.mxu0 0
        %1077 = vmatprep.subr.bf16.mxu0 0
        %1078 = vmatpush1.bf16.xpose.msra.mxu0 0
        %1079 = vmatprep.mubr.bf16.mxu0 0
        %1080 = vmatmul.mubr.bf16.gmra.mrb[0].mxu0 %v1042
        %v1081 = vpop.f32.mrb[0].mxu0
        %v1082 = vadd.f32 0.0, %v1081
        %v1083 = vpop.f32.mrb[0].mxu0
        %v1084 = vpop.f32.mrb[0].mxu0
        %v1085 = vpop.f32.mrb[0].mxu0
        %1086 = vdwg.mxu0
        %v1087 = vsel %vm922, %v1082, -inf
        %1088 = vmax.xlane.f32.xlu0 %v1087
        %v1089 = vpop.xlane.xlu0 %1088
        %v1090 = vsub.f32 %v1082, %v1089
        %v1091 = vmul.f32 %v1090, 1.442695
        %v1092 = vpow.pop %v1091
        %v1093 = vsel %vm922, %v1092, 0.0
        %1094 = vadd.xlane.f32.xlu0 %v1093
        %v1095 = vpop.xlane.xlu0 %1094
        %v1096 = vrcp.pop %v1095
        %v1097 = vmul.f32 %v1092, %v1096
        %v1098 = vpack.c.bf16 %v1097, %v1097
        %v1100 = vunpack.c.l.b16 %v1032
        %v1101 = vpack.c.b16 %v1100, %v1100
        %1102 = vrot.lane.b32.xlu0 %v1101, 120
        %v1103 = vpop.permute.xlu0 %1102
        %v1105 = vsel %vm922, %v1098, 0
        %v1108 = vsel %vm984, %v1103, 0
        %1110 = vmatprep.subr.bf16.mxu0 0
        %1111 = vmatpush1.bf16.msra.mxu0 %v1108
        %1112 = vmatprep.subr.bf16.mxu0 0
        %1113 = vmatpush1.bf16.msra.mxu0 0
        %1114 = vmatprep.subr.bf16.mxu0 0
        %1115 = vmatpush1.bf16.msra.mxu0 0
        %1116 = vmatprep.subr.bf16.mxu0 0
        %1117 = vmatpush1.bf16.msra.mxu0 0
        %1118 = vmatprep.subr.bf16.mxu0 0
        %1119 = vmatpush1.bf16.msra.mxu0 0
        %1120 = vmatprep.subr.bf16.mxu0 0
        %1121 = vmatpush1.bf16.msra.mxu0 0
        %1122 = vmatprep.subr.bf16.mxu0 0
        %1123 = vmatpush1.bf16.msra.mxu0 0
        %1124 = vmatprep.subr.bf16.mxu0 0
        %1125 = vmatpush1.bf16.msra.mxu0 0
        %1126 = vmatprep.subr.bf16.mxu0 0
        %1127 = vmatpush1.bf16.msra.mxu0 0
        %1128 = vmatprep.subr.bf16.mxu0 0
        %1129 = vmatpush1.bf16.msra.mxu0 0
        %1130 = vmatprep.subr.bf16.mxu0 0
        %1131 = vmatpush1.bf16.msra.mxu0 0
        %1132 = vmatprep.subr.bf16.mxu0 0
        %1133 = vmatpush1.bf16.msra.mxu0 0
        %1134 = vmatprep.subr.bf16.mxu0 0
        %1135 = vmatpush1.bf16.msra.mxu0 0
        %1136 = vmatprep.subr.bf16.mxu0 0
        %1137 = vmatpush1.bf16.msra.mxu0 0
        %1138 = vmatprep.subr.bf16.mxu0 0
        %1139 = vmatpush1.bf16.msra.mxu0 0
        %1140 = vmatprep.subr.bf16.mxu0 0
        %1141 = vmatpush1.bf16.msra.mxu0 0
        %1142 = vmatprep.mubr.bf16.mxu0 0
        %1143 = vmatmul.mubr.bf16.gmra.mrb[0].mxu0 %v1105
        %v1144 = vpop.f32.mrb[0].mxu0
        %v1145 = vadd.f32 0.0, %v1144
        %v1146 = vpop.f32.mrb[0].mxu0
        %v1147 = vpop.f32.mrb[0].mxu0
        %v1148 = vpop.f32.mrb[0].mxu0
        %1149 = vdwg.mxu0
        %v1150 = vpack.c.bf16 %v1145, %v1145
        %v1152 = vunpack.c.l.b16 %v1150
        %v1153 = vpack.c.b16 %v1152, %v1152
        %1154 = vrot.lane.b32.xlu0 %v1153, 8
        %v1155 = vpop.permute.xlu0 %1154
        %vm1157 = vcmask 126016
        %1158 = vst.msk [vmem:[#allocation5] sm:$0xf] %vm1157, %v1155
        %v1159 = vld [vmem:[#allocation3] sm:$0xf]
        %v1160 = vld [vmem:[#allocation4] sm:$0xf]
        %1161 = vrot.lane.b32.xlu0 %v919, 112
        %v1162 = vpop.permute.xlu0 %1161
        %v1164 = vunpack.c.l.b16 %v1159
        %v1165 = vpack.c.b16 %v1164, %v1164
        %1166 = vrot.lane.b32.xlu0 %v1165, 112
        %v1167 = vpop.permute.xlu0 %1166
        %v1169 = vsel %vm922, %v1162, 0
        %v1172 = vsel %vm922, %v1167, 0
        %1174 = vmatprep.subr.bf16.mxu0 0
        %1175 = vmatpush1.bf16.xpose.msra.mxu0 %v1172
        %1176 = vmatprep.subr.bf16.mxu0 0
        %1177 = vmatpush1.bf16.xpose.msra.mxu0 0
        %1178 = vmatprep.subr.bf16.mxu0 0
        %1179 = vmatpush1.bf16.xpose.msra.mxu0 0
        %1180 = vmatprep.subr.bf16.mxu0 0
        %1181 = vmatpush1.bf16.xpose.msra.mxu0 0
        %1182 = vmatprep.subr.bf16.mxu0 0
        %1183 = vmatpush1.bf16.xpose.msra.mxu0 0
        %1184 = vmatprep.subr.bf16.mxu0 0
        %1185 = vmatpush1.bf16.xpose.msra.mxu0 0
        %1186 = vmatprep.subr.bf16.mxu0 0
        %1187 = vmatpush1.bf16.xpose.msra.mxu0 0
        %1188 = vmatprep.subr.bf16.mxu0 0
        %1189 = vmatpush1.bf16.xpose.msra.mxu0 0
        %1190 = vmatprep.subr.bf16.mxu0 0
        %1191 = vmatpush1.bf16.xpose.msra.mxu0 0
        %1192 = vmatprep.subr.bf16.mxu0 0
        %1193 = vmatpush1.bf16.xpose.msra.mxu0 0
        %1194 = vmatprep.subr.bf16.mxu0 0
        %1195 = vmatpush1.bf16.xpose.msra.mxu0 0
        %1196 = vmatprep.subr.bf16.mxu0 0
        %1197 = vmatpush1.bf16.xpose.msra.mxu0 0
        %1198 = vmatprep.subr.bf16.mxu0 0
        %1199 = vmatpush1.bf16.xpose.msra.mxu0 0
        %1200 = vmatprep.subr.bf16.mxu0 0
        %1201 = vmatpush1.bf16.xpose.msra.mxu0 0
        %1202 = vmatprep.subr.bf16.mxu0 0
        %1203 = vmatpush1.bf16.xpose.msra.mxu0 0
        %1204 = vmatprep.subr.bf16.mxu0 0
        %1205 = vmatpush1.bf16.xpose.msra.mxu0 0
        %1206 = vmatprep.mubr.bf16.mxu0 0
        %1207 = vmatmul.mubr.bf16.gmra.mrb[0].mxu0 %v1169
        %v1208 = vpop.f32.mrb[0].mxu0
        %v1209 = vadd.f32 0.0, %v1208
        %v1210 = vpop.f32.mrb[0].mxu0
        %v1211 = vpop.f32.mrb[0].mxu0
        %v1212 = vpop.f32.mrb[0].mxu0
        %1213 = vdwg.mxu0
        %v1214 = vsel %vm922, %v1209, -inf
        %1215 = vmax.xlane.f32.xlu0 %v1214
        %v1216 = vpop.xlane.xlu0 %1215
        %v1217 = vsub.f32 %v1209, %v1216
        %v1218 = vmul.f32 %v1217, 1.442695
        %v1219 = vpow.pop %v1218
        %v1220 = vsel %vm922, %v1219, 0.0
        %1221 = vadd.xlane.f32.xlu0 %v1220
        %v1222 = vpop.xlane.xlu0 %1221
        %v1223 = vrcp.pop %v1222
        %v1224 = vmul.f32 %v1219, %v1223
        %v1225 = vpack.c.bf16 %v1224, %v1224
        %v1227 = vunpack.c.l.b16 %v1160
        %v1228 = vpack.c.b16 %v1227, %v1227
        %1229 = vrot.lane.b32.xlu0 %v1228, 112
        %v1230 = vpop.permute.xlu0 %1229
        %v1232 = vsel %vm922, %v1225, 0
        %v1235 = vsel %vm984, %v1230, 0
        %1237 = vmatprep.subr.bf16.mxu0 0
        %1238 = vmatpush1.bf16.msra.mxu0 %v1235
        %1239 = vmatprep.subr.bf16.mxu0 0
        %1240 = vmatpush1.bf16.msra.mxu0 0
        %1241 = vmatprep.subr.bf16.mxu0 0
        %1242 = vmatpush1.bf16.msra.mxu0 0
        %1243 = vmatprep.subr.bf16.mxu0 0
        %1244 = vmatpush1.bf16.msra.mxu0 0
        %1245 = vmatprep.subr.bf16.mxu0 0
        %1246 = vmatpush1.bf16.msra.mxu0 0
        %1247 = vmatprep.subr.bf16.mxu0 0
        %1248 = vmatpush1.bf16.msra.mxu0 0
        %1249 = vmatprep.subr.bf16.mxu0 0
        %1250 = vmatpush1.bf16.msra.mxu0 0
        %1251 = vmatprep.subr.bf16.mxu0 0
        %1252 = vmatpush1.bf16.msra.mxu0 0
        %1253 = vmatprep.subr.bf16.mxu0 0
        %1254 = vmatpush1.bf16.msra.mxu0 0
        %1255 = vmatprep.subr.bf16.mxu0 0
        %1256 = vmatpush1.bf16.msra.mxu0 0
        %1257 = vmatprep.subr.bf16.mxu0 0
        %1258 = vmatpush1.bf16.msra.mxu0 0
        %1259 = vmatprep.subr.bf16.mxu0 0
        %1260 = vmatpush1.bf16.msra.mxu0 0
        %1261 = vmatprep.subr.bf16.mxu0 0
        %1262 = vmatpush1.bf16.msra.mxu0 0
        %1263 = vmatprep.subr.bf16.mxu0 0
        %1264 = vmatpush1.bf16.msra.mxu0 0
        %1265 = vmatprep.subr.bf16.mxu0 0
        %1266 = vmatpush1.bf16.msra.mxu0 0
        %1267 = vmatprep.subr.bf16.mxu0 0
        %1268 = vmatpush1.bf16.msra.mxu0 0
        %1269 = vmatprep.mubr.bf16.mxu0 0
        %1270 = vmatmul.mubr.bf16.gmra.mrb[0].mxu0 %v1232
        %v1271 = vpop.f32.mrb[0].mxu0
        %v1272 = vadd.f32 0.0, %v1271
        %v1273 = vpop.f32.mrb[0].mxu0
        %v1274 = vpop.f32.mrb[0].mxu0
        %v1275 = vpop.f32.mrb[0].mxu0
        %1276 = vdwg.mxu0
        %v1277 = vpack.c.bf16 %v1272, %v1272
        %v1279 = vunpack.c.l.b16 %v1277
        %v1280 = vpack.c.b16 %v1279, %v1279
        %1281 = vrot.lane.b32.xlu0 %v1280, 16
        %v1282 = vpop.permute.xlu0 %1281
        %vm1284 = vcmask 191616
        %1285 = vst.msk [vmem:[#allocation5] sm:$0xf] %vm1284, %v1282
        %v1286 = vld [vmem:[#allocation3] sm:$0xf]
        %v1287 = vld [vmem:[#allocation4] sm:$0xf]
        %1288 = vrot.lane.b32.xlu0 %v919, 104
        %v1289 = vpop.permute.xlu0 %1288
        %v1291 = vunpack.c.l.b16 %v1286
        %v1292 = vpack.c.b16 %v1291, %v1291
        %1293 = vrot.lane.b32.xlu0 %v1292, 104
        %v1294 = vpop.permute.xlu0 %1293
        %v1296 = vsel %vm922, %v1289, 0
        %v1299 = vsel %vm922, %v1294, 0
        %1301 = vmatprep.subr.bf16.mxu0 0
        %1302 = vmatpush1.bf16.xpose.msra.mxu0 %v1299
        %1303 = vmatprep.subr.bf16.mxu0 0
        %1304 = vmatpush1.bf16.xpose.msra.mxu0 0
        %1305 = vmatprep.subr.bf16.mxu0 0
        %1306 = vmatpush1.bf16.xpose.msra.mxu0 0
        %1307 = vmatprep.subr.bf16.mxu0 0
        %1308 = vmatpush1.bf16.xpose.msra.mxu0 0
        %1309 = vmatprep.subr.bf16.mxu0 0
        %1310 = vmatpush1.bf16.xpose.msra.mxu0 0
        %1311 = vmatprep.subr.bf16.mxu0 0
        %1312 = vmatpush1.bf16.xpose.msra.mxu0 0
        %1313 = vmatprep.subr.bf16.mxu0 0
        %1314 = vmatpush1.bf16.xpose.msra.mxu0 0
        %1315 = vmatprep.subr.bf16.mxu0 0
        %1316 = vmatpush1.bf16.xpose.msra.mxu0 0
        %1317 = vmatprep.subr.bf16.mxu0 0
        %1318 = vmatpush1.bf16.xpose.msra.mxu0 0
        %1319 = vmatprep.subr.bf16.mxu0 0
        %1320 = vmatpush1.bf16.xpose.msra.mxu0 0
        %1321 = vmatprep.subr.bf16.mxu0 0
        %1322 = vmatpush1.bf16.xpose.msra.mxu0 0
        %1323 = vmatprep.subr.bf16.mxu0 0
        %1324 = vmatpush1.bf16.xpose.msra.mxu0 0
        %1325 = vmatprep.subr.bf16.mxu0 0
        %1326 = vmatpush1.bf16.xpose.msra.mxu0 0
        %1327 = vmatprep.subr.bf16.mxu0 0
        %1328 = vmatpush1.bf16.xpose.msra.mxu0 0
        %1329 = vmatprep.subr.bf16.mxu0 0
        %1330 = vmatpush1.bf16.xpose.msra.mxu0 0
        %1331 = vmatprep.subr.bf16.mxu0 0
        %1332 = vmatpush1.bf16.xpose.msra.mxu0 0
        %1333 = vmatprep.mubr.bf16.mxu0 0
        %1334 = vmatmul.mubr.bf16.gmra.mrb[0].mxu0 %v1296
        %v1335 = vpop.f32.mrb[0].mxu0
        %v1336 = vadd.f32 0.0, %v1335
        %v1337 = vpop.f32.mrb[0].mxu0
        %v1338 = vpop.f32.mrb[0].mxu0
        %v1339 = vpop.f32.mrb[0].mxu0
        %1340 = vdwg.mxu0
        %v1341 = vsel %vm922, %v1336, -inf
        %1342 = vmax.xlane.f32.xlu0 %v1341
        %v1343 = vpop.xlane.xlu0 %1342
        %v1344 = vsub.f32 %v1336, %v1343
        %v1345 = vmul.f32 %v1344, 1.442695
        %v1346 = vpow.pop %v1345
        %v1347 = vsel %vm922, %v1346, 0.0
        %1348 = vadd.xlane.f32.xlu0 %v1347
        %v1349 = vpop.xlane.xlu0 %1348
        %v1350 = vrcp.pop %v1349
        %v1351 = vmul.f32 %v1346, %v1350
        %v1352 = vpack.c.bf16 %v1351, %v1351
        %v1354 = vunpack.c.l.b16 %v1287
        %v1355 = vpack.c.b16 %v1354, %v1354
        %1356 = vrot.lane.b32.xlu0 %v1355, 104
        %v1357 = vpop.permute.xlu0 %1356
        %v1359 = vsel %vm922, %v1352, 0
        %v1362 = vsel %vm984, %v1357, 0
        %1364 = vmatprep.subr.bf16.mxu0 0
        %1365 = vmatpush1.bf16.msra.mxu0 %v1362
        %1366 = vmatprep.subr.bf16.mxu0 0
        %1367 = vmatpush1.bf16.msra.mxu0 0
        %1368 = vmatprep.subr.bf16.mxu0 0
        %1369 = vmatpush1.bf16.msra.mxu0 0
        %1370 = vmatprep.subr.bf16.mxu0 0
        %1371 = vmatpush1.bf16.msra.mxu0 0
        %1372 = vmatprep.subr.bf16.mxu0 0
        %1373 = vmatpush1.bf16.msra.mxu0 0
        %1374 = vmatprep.subr.bf16.mxu0 0
        %1375 = vmatpush1.bf16.msra.mxu0 0
        %1376 = vmatprep.subr.bf16.mxu0 0
        %1377 = vmatpush1.bf16.msra.mxu0 0
        %1378 = vmatprep.subr.bf16.mxu0 0
        %1379 = vmatpush1.bf16.msra.mxu0 0
        %1380 = vmatprep.subr.bf16.mxu0 0
        %1381 = vmatpush1.bf16.msra.mxu0 0
        %1382 = vmatprep.subr.bf16.mxu0 0
        %1383 = vmatpush1.bf16.msra.mxu0 0
        %1384 = vmatprep.subr.bf16.mxu0 0
        %1385 = vmatpush1.bf16.msra.mxu0 0
        %1386 = vmatprep.subr.bf16.mxu0 0
        %1387 = vmatpush1.bf16.msra.mxu0 0
        %1388 = vmatprep.subr.bf16.mxu0 0
        %1389 = vmatpush1.bf16.msra.mxu0 0
        %1390 = vmatprep.subr.bf16.mxu0 0
        %1391 = vmatpush1.bf16.msra.mxu0 0
        %1392 = vmatprep.subr.bf16.mxu0 0
        %1393 = vmatpush1.bf16.msra.mxu0 0
        %1394 = vmatprep.subr.bf16.mxu0 0
        %1395 = vmatpush1.bf16.msra.mxu0 0
        %1396 = vmatprep.mubr.bf16.mxu0 0
        %1397 = vmatmul.mubr.bf16.gmra.mrb[0].mxu0 %v1359
        %v1398 = vpop.f32.mrb[0].mxu0
        %v1399 = vadd.f32 0.0, %v1398
        %v1400 = vpop.f32.mrb[0].mxu0
        %v1401 = vpop.f32.mrb[0].mxu0
        %v1402 = vpop.f32.mrb[0].mxu0
        %1403 = vdwg.mxu0
        %v1404 = vpack.c.bf16 %v1399, %v1399
        %v1406 = vunpack.c.l.b16 %v1404
        %v1407 = vpack.c.b16 %v1406, %v1406
        %1408 = vrot.lane.b32.xlu0 %v1407, 24
        %v1409 = vpop.permute.xlu0 %1408
        %vm1411 = vcmask 257216
        %1412 = vst.msk [vmem:[#allocation5] sm:$0xf] %vm1411, %v1409
        %v1413 = vld [vmem:[#allocation5] sm:$0xf]
        %v1414 = vld [vmem:[%s10] sm:$0xf]
        %v1415 = vld [vmem:[%s10 + $0x4] sm:$0xf]
        %v1416 = vld [vmem:[%s10 + $0x8] sm:$0xf]
        %v1417 = vld [vmem:[%s10 + $0xc] sm:$0xf]
        %v1418 = vld [vmem:[%s11] sm:$0x1]
        %v1420 = vlaneseq
        %v1421 = vshrl.u32 %v1420, 7
        %v1422 = vsub.s32 0, %v1421
        %v1423 = vrot.slane %v1418, %v1422
        %v1429 = vunpack.c.l.b16 %v1414
        %v1430 = vunpack.c.l.b16 %v1415
        %v1431 = vunpack.c.l.b16 %v1416
        %v1432 = vunpack.c.l.b16 %v1417
        %v1433 = vpack.c.b16 %v1430, %v1429
        %v1434 = vpack.c.b16 %v1432, %v1431
        %v1438 = vsel %vm875, %v1413, 0
        %1440 = vmatprep.subr.bf16.mxu0 0
        %1441 = vmatpush1.bf16.msra.mxu0 %v1433
        %1442 = vmatprep.subr.bf16.mxu0 0
        %1443 = vmatpush1.bf16.msra.mxu0 %v1434
        %1444 = vmatprep.subr.bf16.mxu0 0
        %1445 = vmatpush1.bf16.msra.mxu0 0
        %1446 = vmatprep.subr.bf16.mxu0 0
        %1447 = vmatpush1.bf16.msra.mxu0 0
        %1448 = vmatprep.subr.bf16.mxu0 0
        %1449 = vmatpush1.bf16.msra.mxu0 0
        %1450 = vmatprep.subr.bf16.mxu0 0
        %1451 = vmatpush1.bf16.msra.mxu0 0
        %1452 = vmatprep.subr.bf16.mxu0 0
        %1453 = vmatpush1.bf16.msra.mxu0 0
        %1454 = vmatprep.subr.bf16.mxu0 0
        %1455 = vmatpush1.bf16.msra.mxu0 0
        %1456 = vmatprep.subr.bf16.mxu0 0
        %1457 = vmatpush1.bf16.msra.mxu0 0
        %1458 = vmatprep.subr.bf16.mxu0 0
        %1459 = vmatpush1.bf16.msra.mxu0 0
        %1460 = vmatprep.subr.bf16.mxu0 0
        %1461 = vmatpush1.bf16.msra.mxu0 0
        %1462 = vmatprep.subr.bf16.mxu0 0
        %1463 = vmatpush1.bf16.msra.mxu0 0
        %1464 = vmatprep.subr.bf16.mxu0 0
        %1465 = vmatpush1.bf16.msra.mxu0 0
        %1466 = vmatprep.subr.bf16.mxu0 0
        %1467 = vmatpush1.bf16.msra.mxu0 0
        %1468 = vmatprep.subr.bf16.mxu0 0
        %1469 = vmatpush1.bf16.msra.mxu0 0
        %1470 = vmatprep.subr.bf16.mxu0 0
        %1471 = vmatpush1.bf16.msra.mxu0 0
        %1472 = vmatprep.mubr.bf16.mxu0 0
        %1473 = vmatmul.mubr.bf16.gmra.mrb[0].mxu0 %v1438
        %v1474 = vpop.f32.mrb[0].mxu0
        %v1475 = vadd.f32 %v1423, %v1474
        %v1476 = vpop.f32.mrb[0].mxu0
        %v1477 = vpop.f32.mrb[0].mxu0
        %v1478 = vpop.f32.mrb[0].mxu0
        %1479 = vdwg.mxu0
        %v1480 = vadd.f32 %v845, %v1475
        %v1481 = vld [vmem:[%s12] sm:$0x1]
        %v1482 = vld [vmem:[%s13] sm:$0x1]
        %v1483 = vsel %vm875, %v1480, 0.0
        %1484 = vadd.xlane.f32.xlu0 %v1483
        %v1485 = vpop.xlane.xlu0 %1484
        %v1486 = vrcp.pop 32.0
        %v1487 = vmul.f32 %v1485, %v1486
        %v1488 = vsub.f32 %v1480, %v1487
        %v1489 = vmul.f32 %v1488, %v1488
        %v1490 = vsel %vm875, %v1489, 0.0
        %1491 = vadd.xlane.f32.xlu0 %v1490
        %v1492 = vpop.xlane.xlu0 %1491
        %v1493 = vmul.f32 %v1492, %v1486
        %v1494 = vadd.f32 %v1493, 1e-05
        %v1495 = vrsqrt.pop %v1494
        %v1496 = vmul.f32 %v1488, %v1495
        %v1498 = vlaneseq
        %v1499 = vshrl.u32 %v1498, 7
        %v1500 = vsub.s32 0, %v1499
        %v1501 = vrot.slane %v1481, %v1500
        %v1503 = vmul.f32 %v1496, %v1501
        %v1505 = vlaneseq
        %v1506 = vshrl.u32 %v1505, 7
        %v1507 = vsub.s32 0, %v1506
        %v1508 = vrot.slane %v1482, %v1507
        %v1510 = vadd.f32 %v1503, %v1508
        %v1511 = vpack.c.bf16 %v1510, %v1510
        %v1512 = vld [vmem:[%s14] sm:$0xf]
        %v1513 = vld [vmem:[%s14 + $0x4] sm:$0xf]
        %v1514 = vld [vmem:[%s14 + $0x8] sm:$0xf]
        %v1515 = vld [vmem:[%s14 + $0xc] sm:$0xf]
        %v1516 = vld [vmem:[%s15] sm:$0x1]
        %v1518 = vlaneseq
        %v1519 = vshrl.u32 %v1518, 7
        %v1520 = vsub.s32 0, %v1519
        %v1521 = vrot.slane %v1516, %v1520
        %v1527 = vunpack.c.l.b16 %v1512
        %v1528 = vunpack.c.l.b16 %v1513
        %v1529 = vunpack.c.l.b16 %v1514
        %v1530 = vunpack.c.l.b16 %v1515
        %v1531 = vpack.c.b16 %v1528, %v1527
        %v1532 = vpack.c.b16 %v1530, %v1529
        %v1536 = vsel %vm875, %v1511, 0
        %1538 = vmatprep.subr.bf16.mxu0 0
        %1539 = vmatpush1.bf16.msra.mxu0 %v1531
        %1540 = vmatprep.subr.bf16.mxu0 0
        %1541 = vmatpush1.bf16.msra.mxu0 %v1532
        %1542 = vmatprep.subr.bf16.mxu0 0
        %1543 = vmatpush1.bf16.msra.mxu0 0
        %1544 = vmatprep.subr.bf16.mxu0 0
        %1545 = vmatpush1.bf16.msra.mxu0 0
        %1546 = vmatprep.subr.bf16.mxu0 0
        %1547 = vmatpush1.bf16.msra.mxu0 0
        %1548 = vmatprep.subr.bf16.mxu0 0
        %1549 = vmatpush1.bf16.msra.mxu0 0
        %1550 = vmatprep.subr.bf16.mxu0 0
        %1551 = vmatpush1.bf16.msra.mxu0 0
        %1552 = vmatprep.subr.bf16.mxu0 0
        %1553 = vmatpush1.bf16.msra.mxu0 0
        %1554 = vmatprep.subr.bf16.mxu0 0
        %1555 = vmatpush1.bf16.msra.mxu0 0
        %1556 = vmatprep.subr.bf16.mxu0 0
        %1557 = vmatpush1.bf16.msra.mxu0 0
        %1558 = vmatprep.subr.bf16.mxu0 0
        %1559 = vmatpush1.bf16.msra.mxu0 0
        %1560 = vmatprep.subr.bf16.mxu0 0
        %1561 = vmatpush1.bf16.msra.mxu0 0
        %1562 = vmatprep.subr.bf16.mxu0 0
        %1563 = vmatpush1.bf16.msra.mxu0 0
        %1564 = vmatprep.subr.bf16.mxu0 0
        %1565 = vmatpush1.bf16.msra.mxu0 0
        %1566 = vmatprep.subr.bf16.mxu0 0
        %1567 = vmatpush1.bf16.msra.mxu0 0
        %1568 = vmatprep.subr.bf16.mxu0 0
        %1569 = vmatpush1.bf16.msra.mxu0 0
        %1570 = vmatprep.mubr.bf16.mxu0 0
        %1571 = vmatmul.mubr.bf16.gmra.mrb[0].mxu0 %v1536
        %v1572 = vpop.f32.mrb[0].mxu0
        %v1573 = vadd.f32 %v1521, %v1572
        %v1574 = vpop.f32.mrb[0].mxu0
        %v1575 = vpop.f32.mrb[0].mxu0
        %v1576 = vpop.f32.mrb[0].mxu0
        %1577 = vdwg.mxu0
        %v1578 = vmul.f32 %v1573, 0.044715
        %v1579 = vmul.f32 %v1578, %v1573
        %v1580 = vmul.f32 %v1579, %v1573
        %v1581 = vadd.f32 %v1573, %v1580
        %v1582 = vmul.f32 %v1581, 0.7978846
        %v1583 = vtanh.pop %v1582
        %v1584 = vmul.f32 %v1573, 0.5
        %v1585 = vadd.f32 %v1583, 1.0
        %v1586 = vmul.f32 %v1584, %v1585
        %v1587 = vpack.c.bf16 %v1586, %v1586
        %v1588 = vld [vmem:[%s16] sm:$0xf]
        %v1589 = vld [vmem:[%s16 + $0x4] sm:$0xf]
        %v1590 = vld [vmem:[%s16 + $0x8] sm:$0xf]
        %v1591 = vld [vmem:[%s16 + $0xc] sm:$0xf]
        %v1592 = vld [vmem:[%s16 + $0x10] sm:$0xf]
        %v1593 = vld [vmem:[%s16 + $0x14] sm:$0xf]
        %v1594 = vld [vmem:[%s16 + $0x18] sm:$0xf]
        %v1595 = vld [vmem:[%s16 + $0x1c] sm:$0xf]
        %v1596 = vld [vmem:[%s16 + $0x20] sm:$0xf]
        %v1597 = vld [vmem:[%s16 + $0x24] sm:$0xf]
        %v1598 = vld [vmem:[%s16 + $0x28] sm:$0xf]
        %v1599 = vld [vmem:[%s16 + $0x2c] sm:$0xf]
        %v1600 = vld [vmem:[%s16 + $0x30] sm:$0xf]
        %v1601 = vld [vmem:[%s16 + $0x34] sm:$0xf]
        %v1602 = vld [vmem:[%s16 + $0x38] sm:$0xf]
        %v1603 = vld [vmem:[%s16 + $0x3c] sm:$0xf]
        %v1604 = vld [vmem:[%s17] sm:$0x1]
        %v1606 = vlaneseq
        %v1607 = vshrl.u32 %v1606, 7
        %v1608 = vsub.s32 0, %v1607
        %v1609 = vrot.slane %v1604, %v1608
        %v1627 = vunpack.c.l.b16 %v1588
        %v1628 = vunpack.c.l.b16 %v1589
        %v1629 = vunpack.c.l.b16 %v1590
        %v1630 = vunpack.c.l.b16 %v1591
        %v1631 = vunpack.c.l.b16 %v1592
        %v1632 = vunpack.c.l.b16 %v1593
        %v1633 = vunpack.c.l.b16 %v1594
        %v1634 = vunpack.c.l.b16 %v1595
        %v1635 = vunpack.c.l.b16 %v1596
        %v1636 = vunpack.c.l.b16 %v1597
        %v1637 = vunpack.c.l.b16 %v1598
        %v1638 = vunpack.c.l.b16 %v1599
        %v1639 = vunpack.c.l.b16 %v1600
        %v1640 = vunpack.c.l.b16 %v1601
        %v1641 = vunpack.c.l.b16 %v1602
        %v1642 = vunpack.c.l.b16 %v1603
        %v1643 = vpack.c.b16 %v1628, %v1627
        %v1644 = vpack.c.b16 %v1630, %v1629
        %v1645 = vpack.c.b16 %v1632, %v1631
        %v1646 = vpack.c.b16 %v1634, %v1633
        %v1647 = vpack.c.b16 %v1636, %v1635
        %v1648 = vpack.c.b16 %v1638, %v1637
        %v1649 = vpack.c.b16 %v1640, %v1639
        %v1650 = vpack.c.b16 %v1642, %v1641
        %1659 = vmatprep.subr.bf16.mxu0 0
        %1660 = vmatpush1.bf16.msra.mxu0 %v1643
        %1661 = vmatprep.subr.bf16.mxu0 0
        %1662 = vmatpush1.bf16.msra.mxu0 %v1644
        %1663 = vmatprep.subr.bf16.mxu0 0
        %1664 = vmatpush1.bf16.msra.mxu0 %v1645
        %1665 = vmatprep.subr.bf16.mxu0 0
        %1666 = vmatpush1.bf16.msra.mxu0 %v1646
        %1667 = vmatprep.subr.bf16.mxu0 0
        %1668 = vmatpush1.bf16.msra.mxu0 %v1647
        %1669 = vmatprep.subr.bf16.mxu0 0
        %1670 = vmatpush1.bf16.msra.mxu0 %v1648
        %1671 = vmatprep.subr.bf16.mxu0 0
        %1672 = vmatpush1.bf16.msra.mxu0 %v1649
        %1673 = vmatprep.subr.bf16.mxu0 0
        %1674 = vmatpush1.bf16.msra.mxu0 %v1650
        %1675 = vmatprep.subr.bf16.mxu0 0
        %1676 = vmatpush1.bf16.msra.mxu0 0
        %1677 = vmatprep.subr.bf16.mxu0 0
        %1678 = vmatpush1.bf16.msra.mxu0 0
        %1679 = vmatprep.subr.bf16.mxu0 0
        %1680 = vmatpush1.bf16.msra.mxu0 0
        %1681 = vmatprep.subr.bf16.mxu0 0
        %1682 = vmatpush1.bf16.msra.mxu0 0
        %1683 = vmatprep.subr.bf16.mxu0 0
        %1684 = vmatpush1.bf16.msra.mxu0 0
        %1685 = vmatprep.subr.bf16.mxu0 0
        %1686 = vmatpush1.bf16.msra.mxu0 0
        %1687 = vmatprep.subr.bf16.mxu0 0
        %1688 = vmatpush1.bf16.msra.mxu0 0
        %1689 = vmatprep.subr.bf16.mxu0 0
        %1690 = vmatpush1.bf16.msra.mxu0 0
        %1691 = vmatprep.mubr.bf16.mxu0 0
        %1692 = vmatmul.mubr.bf16.gmra.mrb[0].mxu0 %v1587
        %v1693 = vpop.f32.mrb[0].mxu0
        %v1694 = vadd.f32 %v1609, %v1693
        %v1695 = vpop.f32.mrb[0].mxu0
        %v1696 = vpop.f32.mrb[0].mxu0
        %v1697 = vpop.f32.mrb[0].mxu0
        %1698 = vdwg.mxu0
        %v1699 = vadd.f32 %v1480, %v1694
        %1700 = vst.msk [vmem:[%s663] sm:$0xff] %vm875, %v1699
        %s1701 = sand.u32 %s449, 1
        %s1702 = scalar_lea.sflag [#allocation8], %s1701
        %s1703 = sand.u32 %s449, 1
        %s1704 = smul.addr %s1703, 8
        %s1705 = scalar_lea.vmem [#allocation14], %s1704
        // Predicated region
        $region113: #{tpu_custom_call.1} parent=91 // pred_check
          %p1706 = pneg %p459
        $region114: #{tpu_custom_call.1} parent=91 // pred_check_branch
          %1708 = sbr.rel (%p1706) target = $region116
        $region115: #{tpu_custom_call.1} parent=91 // pred_region
          %s1710 = ssub.s32 128, 128
          %1711 = vsyncadd %s1702, %s1710
          %s1712 = sadd.s32 %s42, %s41
          %s1713 = smul.addr %s1712, 128
          %s1714 = scalar_lea.hbm %s18, %s1713
          %s1716 = sshll.u32 %s1705, 4
          %s1717 = int_to_ptr.vmem [resolvable:$true] %s1716
          %1719 = dma.vmem_to_hbm [thread:$0]  %s1717, 128, %s1714, %s1702
        $region116: #{tpu_custom_call.1} parent=91 // pred_fallthru
          _
      $region92: #{tpu_custom_call.1} parent=5 // pred_fallthru
        _
      %p1720 = scmp.le.s32.totalorder 2, %s32
      // Predicated region
      $region117: #{tpu_custom_call.1} parent=5 // pred_check
        %p1721 = pneg %p1720
      $region118: #{tpu_custom_call.1} parent=5 // pred_check_branch
        %1723 = sbr.rel (%p1721) target = $region120
      $region119: #{tpu_custom_call.1} parent=5 // pred_region
        %s1724 = ssub.s32 %s32, 2
        // Predicated region
        $region121: #{tpu_custom_call.1} parent=119 // pred_check
          %p1725 = pneg %p465
        $region122: #{tpu_custom_call.1} parent=119 // pred_check_branch
          %1727 = sbr.rel (%p1725) target = $region124
        $region123: #{tpu_custom_call.1} parent=119 // pred_region
          %s1728 = sand.u32 %s450, 1
          %s1729 = scalar_lea.sflag [#allocation8], %s1728
          %s1730 = sand.u32 %s450, 1
          %s1731 = smul.addr %s1730, 8
          %s1732 = scalar_lea.vmem [#allocation14], %s1731
          %1733 = dma.done %s1729, 128
        $region124: #{tpu_custom_call.1} parent=119 // pred_fallthru
          _
      $region120: #{tpu_custom_call.1} parent=5 // pred_fallthru
        _
    $region6: #{tpu_custom_call.1} parent=1 // loop_footer
      %s36 = sadd.s32 1, %s32
    $region7: #{tpu_custom_call.1} parent=1 // loop_footer_branch
      %31 = sbr.rel target = $region3
    $region8: #{tpu_custom_call.1} parent=1 // loop_exit
      _
    %1734 = vsyncpa [#allocation7], 1
    %s1735 = scalar_lea.sflag [#allocation7], 1
    %1736 = vsyncpa %s1735, 1
    %1737 = vsyncpa [#allocation10], 1
    %1738 = vsyncpa [#allocation13], 1
    %1739 = vsyncpa [#allocation8], 1
    %s1740 = scalar_lea.sflag [#allocation8], 1
    %1741 = vsyncpa %s1740, 1

</llo_original>
